<compile_context>
chip_gen: v7x
topology: tpu7x:2x2x1
jax: 0.10.0
libtpu: 0.0.40
codegen_flags: <defaults>
</compile_context>

<pallas_src>
import jax
import jax.numpy as jnp
from jax.experimental import pallas as pl
from jax.experimental.pallas import tpu as pltpu


def _dsconv_kernel(xm_ref, xt_ref, xb_ref, wdw_ref, b1_ref, wpw_ref, b2_ref,
                   out_ref):
    # xm_ref : (1, TH, W, Cin)  this tile's input rows (unpadded, no halo)
    # xt_ref : (1, 1,  W, Cin)  row above the tile (clamped; masked on tile 0)
    # xb_ref : (1, 1,  W, Cin)  row below the tile (clamped; masked on last tile)
    # wdw_ref: (3, 3, Cin)      depthwise weights, BN1 scale folded in (f32)
    # b1_ref : (1, Cin)         folded BN1 bias (f32)
    # wpw_ref: (Cin, Cout)      pointwise weights, BN2 scale folded in
    # b2_ref : (1, Cout)        folded BN2 bias (f32)
    # out_ref: (1, TH, W, Cout)
    i = pl.program_id(1)
    n_rt = pl.num_programs(1)
    TH, W = out_ref.shape[1], out_ref.shape[2]
    Cin = xm_ref.shape[3]
    Cout = out_ref.shape[3]
    f32 = jnp.float32

    wdw = wdw_ref[...].astype(f32)                        # (3, 3, Cin)

    mid = xm_ref[0].astype(f32)                           # (TH, W, Cin)
    # Zero-mask the halo rows that lie outside the image (above row 0 / below
    # row H-1): this realises the k=3, p=1 zero padding along H without ever
    # writing a padded copy of the activations to HBM.
    top = xt_ref[0].astype(f32) * (i > 0).astype(f32)             # (1, W, Cin)
    bot = xb_ref[0].astype(f32) * (i < n_rt - 1).astype(f32)      # (1, W, Cin)

    # Rows feeding the three kh taps: aligned, full-width loads (no W shift).
    if TH > 1:
        rows = (jnp.concatenate([top, mid[:TH - 1]], axis=0),     # kh = 0
                mid,                                              # kh = 1
                jnp.concatenate([mid[1:], bot], axis=0))          # kh = 2
    else:
        rows = (top, mid, bot)

    # Group the 9 depthwise taps by kw so only two 1-column shifts are needed
    # per tile.  Accumulate starting from the first product (no zeros + add).
    def col_sum(kw):
        acc = rows[0] * wdw[0, kw]
        acc = acc + rows[1] * wdw[1, kw]
        acc = acc + rows[2] * wdw[2, kw]
        return acc

    center = col_sum(1)
    left = col_sum(0)     # taps reading input column w-1
    right = col_sum(2)    # taps reading input column w+1
    # TODO(synk): move these two 1-sublane shifts onto the XLU with
    # pltpu.roll(part, +/-1, axis=1) plus an edge mask once the rotate
    # direction is verified on hardware; the zero-column concats are the
    # guaranteed-correct form.
    zcol = jnp.zeros((TH, 1, Cin), f32)
    acc = center
    acc = acc + jnp.concatenate([zcol, left[:, :W - 1]], axis=1)
    acc = acc + jnp.concatenate([right[:, 1:], zcol], axis=1)

    # BN1 bias + ReLU (BN1 scale already folded into wdw).
    y = jnp.maximum(acc + b1_ref[0], 0.0)

    # Pointwise 1x1 conv == matmul over the channel axis on the MXU with f32
    # accumulation.  W % 8 == 0 (checked in the wrapper) makes both reshapes
    # free of (8,128)-tile-crossing relayouts.
    y = y.reshape(TH * W, Cin).astype(wpw_ref.dtype)
    z = jnp.dot(y, wpw_ref[...], preferred_element_type=jnp.float32)

    # BN2 bias + ReLU (BN2 scale already folded into wpw).
    z = jnp.maximum(z + b2_ref[0], 0.0)
    out_ref[0] = z.reshape(TH, W, Cout).astype(out_ref.dtype)


def _vmem_capacity_bytes(default_bytes=64 * 1024 * 1024):
    """Physical per-TensorCore VMEM if discoverable; conservative fallback."""
    try:
        info = pltpu.get_tpu_info()
    except Exception:
        return default_bytes
    for name in ("vmem_capacity_bytes", "vmem_bytes", "vmem_size_bytes"):
        val = getattr(info, name, None)
        if val:
            return int(val)
    return default_bytes


def _pick_block_rows(H, W, Cin, Cout, in_isz, mm_isz, budget_bytes):
    """Largest divisor of H whose working set (double-buffered input/output
    tiles + resident weights + f32 in-kernel temporaries) fits budget_bytes."""
    # Weights / biases / halo rows: resident, but still double-buffered by the
    # pipeliner (constant index maps avoid re-DMA, not the second buffer).
    # TODO(synk): single-buffer these via pipeline_mode=pl.Buffered(1) once that
    # path is validated on-hardware; that would halve this term.
    fixed = 2 * (9 * Cin * 4 + Cin * Cout * mm_isz + (Cin + Cout) * 4
                 + 2 * W * Cin * in_isz)
    per_row = (2 * W * Cin * in_isz        # input tile, 2 pipeline buffers
               + 2 * W * Cout * in_isz     # output tile, 2 pipeline buffers
               + 8 * W * Cin * 4           # f32 temporaries (rows/partials/acc/y)
               + 2 * W * Cout * 4)         # f32 matmul result + epilogue
    avail = max(budget_bytes - fixed, per_row)
    th = max(1, min(H, avail // per_row))
    while H % th:
        th -= 1
    return int(th)


def dsconv3x3_pallas_nhwc(x_nhwc, w_dw, bn1, w_pw, bn2, *, eps=1e-5,
                          block_rows=None, matmul_dtype=None):
    """Fused DSConv3x3 forward (stride=1, dilation=1). x_nhwc: (B, H, W, Cin).

    matmul_dtype: operand dtype fed to the MXU for the pointwise 1x1 matmul.
    Defaults to bfloat16 (with f32 accumulation) -- the MXU accepts bf16 on
    v5e, v6e and v7x alike and f32 operands cost ~3x the passes.  Pass
    jnp.float32 for strict parity with an f32 reference.
    """
    B, H, W, Cin = x_nhwc.shape
    Cout = w_pw.shape[0]
    in_dtype = x_nhwc.dtype

    if W % 8 != 0:
        # TODO(synk): pad W up to a multiple of 8 (or run the pointwise matmul
        # per-row) to support ragged widths.
        raise ValueError(f"W={W} must be a multiple of 8")

    # Fold BatchNorm (inference form) into per-channel scale/bias, then fold
    # the scales into the conv weights (exact) so the kernel only adds bias.
    g1, be1, m1, v1 = bn1
    g2, be2, m2, v2 = bn2
    s1 = g1 / jnp.sqrt(v1 + eps)
    b1 = be1 - m1 * s1
    s2 = g2 / jnp.sqrt(v2 + eps)
    b2 = be2 - m2 * s2

    if matmul_dtype is None:
        matmul_dtype = jnp.bfloat16

    # PyTorch depthwise weight (Cin,1,3,3) -> (3,3,Cin), BN1 scale folded in.
    wdw_k = (jnp.transpose(w_dw[:, 0, :, :], (1, 2, 0)) * s1[None, None, :]
             ).astype(jnp.float32)
    # PyTorch pointwise weight (Cout,Cin,1,1) -> (Cin,Cout), BN2 scale folded in.
    wpw_k = (jnp.transpose(w_pw[:, :, 0, 0], (1, 0)) * s2[None, :]
             ).astype(matmul_dtype)
    b1_k = b1.reshape(1, Cin).astype(jnp.float32)
    b2_k = b2.reshape(1, Cout).astype(jnp.float32)

    in_isz = jnp.dtype(in_dtype).itemsize
    mm_isz = jnp.dtype(matmul_dtype).itemsize

    # Generation-aware VMEM budgeting: scoped limit = min(64 MiB, half physical)
    # (64 MiB on v5e/v6e's 128 MiB, 32 MiB on v7x's 64 MiB or when unknown),
    # ~40% of that for the row-tile working set.
    vmem_cap = _vmem_capacity_bytes()
    vmem_limit = int(min(64 * 1024 * 1024, vmem_cap // 2))
    if block_rows is None:
        block_rows = _pick_block_rows(H, W, Cin, Cout, in_isz, mm_isz,
                                      budget_bytes=int(vmem_limit * 0.4))
    TH = int(block_rows)
    if H % TH:
        raise ValueError(f"block_rows={TH} must divide H={H}")
    n_rt = H // TH

    cost = pl.CostEstimate(
        flops=int(2 * B * H * W * Cin * (9 + Cout)),
        transcendentals=0,
        bytes_accessed=int(B * (H + 2 * n_rt) * W * Cin * in_isz   # input + halo re-reads
                           + B * H * W * Cout * in_isz             # output
                           + wdw_k.size * 4 + wpw_k.size * mm_isz),
    )

    # Input row tiles (no halo) plus the single rows directly above / below each
    # tile.  The out-of-image rows (above row 0 / below row H-1) are clamped to
    # a valid row here and zero-masked inside the kernel, realising the conv's
    # zero padding without an HBM pad pre-pass.
    x_mid_spec = pl.BlockSpec((1, TH, W, Cin), lambda b, i: (b, i, 0, 0))
    x_top_spec = pl.BlockSpec(
        (1, 1, W, Cin), lambda b, i: (b, jnp.maximum(i * TH - 1, 0), 0, 0))
    x_bot_spec = pl.BlockSpec(
        (1, 1, W, Cin), lambda b, i: (b, jnp.minimum((i + 1) * TH, H - 1), 0, 0))
    # Weights / biases: constant index maps -> kept resident (no re-DMA across
    # grid steps).
    wdw_spec = pl.BlockSpec((3, 3, Cin), lambda b, i: (0, 0, 0))
    b1_spec = pl.BlockSpec((1, Cin), lambda b, i: (0, 0))
    wpw_spec = pl.BlockSpec((Cin, Cout), lambda b, i: (0, 0))
    b2_spec = pl.BlockSpec((1, Cout), lambda b, i: (0, 0))
    out_spec = pl.BlockSpec((1, TH, W, Cout), lambda b, i: (b, i, 0, 0))
    # TODO(synk): for Cin/Cout << 128 this NHWC layout under-fills lanes and the
    # output stores are masked (vst.msk); such layers should pad channels to a
    # lane-friendly multiple or switch to a W-on-lanes layout.

    return pl.pallas_call(
        _dsconv_kernel,
        out_shape=jax.ShapeDtypeStruct((B, H, W, Cout), in_dtype),
        grid_spec=pltpu.PrefetchScalarGridSpec(
            num_scalar_prefetch=0,
            grid=(B, n_rt),
            in_specs=[x_mid_spec, x_top_spec, x_bot_spec,
                      wdw_spec, b1_spec, wpw_spec, b2_spec],
            out_specs=out_spec,
        ),
        compiler_params=pltpu.CompilerParams(
            dimension_semantics=("parallel", "parallel"),
            vmem_limit_bytes=vmem_limit,
        ),
        cost_estimate=cost,
    )(x_nhwc, x_nhwc, x_nhwc, wdw_k, b1_k, wpw_k, b2_k)


def dsconv3x3_pallas(x_nchw, w_dw, bn1, w_pw, bn2, *, eps=1e-5,
                     block_rows=None, matmul_dtype=None):
    """PyTorch-layout entry point: x (B, Cin, H, W) -> (B, Cout, H, W).
    Frameworks that can stay NHWC end-to-end should call dsconv3x3_pallas_nhwc
    directly and skip these two transposes (one full HBM pass each)."""
    x_nhwc = jnp.transpose(x_nchw, (0, 2, 3, 1))
    out = dsconv3x3_pallas_nhwc(x_nhwc, w_dw, bn1, w_pw, bn2, eps=eps,
                                block_rows=block_rows, matmul_dtype=matmul_dtype)
    return jnp.transpose(out, (0, 3, 1, 2))


def _reference(x_nchw, w_dw, bn1, w_pw, bn2, eps=1e-5):
    """Pure-jnp reference of the same forward pass (NCHW, unfused, f32)."""
    B, Cin, H, W = x_nchw.shape
    g1, be1, m1, v1 = bn1
    g2, be2, m2, v2 = bn2

    xp = jnp.pad(x_nchw, ((0, 0), (0, 0), (1, 1), (1, 1)))
    y = jnp.zeros((B, Cin, H, W), jnp.float32)
    for kh in range(3):
        for kw in range(3):
            y = y + xp[:, :, kh:kh + H, kw:kw + W] * w_dw[:, 0, kh, kw][None, :, None, None]
    s1 = (g1 / jnp.sqrt(v1 + eps))[None, :, None, None]
    b1 = (be1 - m1 * g1 / jnp.sqrt(v1 + eps))[None, :, None, None]
    y = jnp.maximum(y * s1 + b1, 0.0)

    y2 = jnp.einsum('bihw,oi->bohw', y, w_pw[:, :, 0, 0])
    s2 = (g2 / jnp.sqrt(v2 + eps))[None, :, None, None]
    b2 = (be2 - m2 * g2 / jnp.sqrt(v2 + eps))[None, :, None, None]
    return jnp.maximum(y2 * s2 + b2, 0.0)


if __name__ == "__main__":
    B, Cin, Cout, H, W = 2, 4, 8, 16, 16
    key = jax.random.PRNGKey(0)
    k_x, k_dw, k_pw, k_g1, k_b1, k_g2, k_b2 = jax.random.split(key, 7)

    x = jax.random.normal(k_x, (B, Cin, H, W), jnp.float32)
    w_dw = jax.random.normal(k_dw, (Cin, 1, 3, 3), jnp.float32) * 0.3     # depthwise
    w_pw = jax.random.normal(k_pw, (Cout, Cin, 1, 1), jnp.float32) * 0.3  # pointwise
    bn1 = (jax.random.normal(k_g1, (Cin,)) * 0.1 + 1.0,   # gamma
           jax.random.normal(k_b1, (Cin,)) * 0.1,         # beta
           jnp.zeros((Cin,), jnp.float32),                # running_mean
           jnp.ones((Cin,), jnp.float32))                 # running_var
    bn2 = (jax.random.normal(k_g2, (Cout,)) * 0.1 + 1.0,
           jax.random.normal(k_b2, (Cout,)) * 0.1,
           jnp.zeros((Cout,), jnp.float32),
           jnp.ones((Cout,), jnp.float32))

    ref = _reference(x, w_dw, bn1, w_pw, bn2)

    run = jax.jit(dsconv3x3_pallas,
                  static_argnames=("eps", "block_rows", "matmul_dtype"))

    # Default path: auto tile size, bf16 MXU feed for the pointwise matmul.
    out = jax.block_until_ready(run(x, w_dw, bn1, w_pw, bn2))
    assert out.shape == (B, Cout, H, W), out.shape
    err_bf16 = float(jnp.max(jnp.abs(out - ref)))
    assert err_bf16 < 0.1, err_bf16

    # f32 MXU feed, spatially tiled: grid = (B, H // 8) with the 1-row halo
    # fetched via the clamped neighbor-row specs and masked in-kernel.
    out_f32 = jax.block_until_ready(
        run(x, w_dw, bn1, w_pw, bn2, block_rows=8, matmul_dtype=jnp.float32))
    err_f32 = float(jnp.max(jnp.abs(out_f32 - ref)))
    assert jnp.allclose(out_f32, ref, atol=1e-4, rtol=1e-4), err_f32

    # Smaller tiles: exercises first/middle/last-tile halo masking.
    out_t4 = jax.block_until_ready(
        run(x, w_dw, bn1, w_pw, bn2, block_rows=4, matmul_dtype=jnp.float32))
    err_t4 = float(jnp.max(jnp.abs(out_t4 - ref)))
    assert jnp.allclose(out_t4, ref, atol=1e-4, rtol=1e-4), err_t4

    print("KERNEL_OK")
</pallas_src>

<mosaic_0001>
module attributes {stable_mosaic.version = 11 : i64} {
  func.func @_dsconv_kernel(%arg0: i32, %arg1: i32, %arg2: memref<1x16x16x4xf32, #tpu.memory_space<vmem>>, %arg3: memref<1x1x16x4xf32, #tpu.memory_space<vmem>>, %arg4: memref<1x1x16x4xf32, #tpu.memory_space<vmem>>, %arg5: memref<3x3x4xf32, #tpu.memory_space<vmem>>, %arg6: memref<1x4xf32, #tpu.memory_space<vmem>>, %arg7: memref<4x8xbf16, #tpu.memory_space<vmem>>, %arg8: memref<1x8xf32, #tpu.memory_space<vmem>>, %arg9: memref<1x16x16x8xf32, #tpu.memory_space<vmem>>) attributes {dimension_semantics = [#tpu.dimension_semantics<parallel>, #tpu.dimension_semantics<parallel>], iteration_bounds = array<i64: 2, 1>, scalar_prefetch = 0 : i64, scratch_operands = 0 : i64, tpu.core_type = #tpu.core_type<tc>, window_params = [{transform_indices = @transform_0, window_bounds = array<i64: 1, 16, 16, 4>}, {transform_indices = @transform_1, window_bounds = array<i64: 1, 1, 16, 4>}, {transform_indices = @transform_2, window_bounds = array<i64: 1, 1, 16, 4>}, {pipeline_mode = #tpu.pipeline_mode<synchronous>, transform_indices = @transform_3, window_bounds = array<i64: 3, 3, 4>}, {pipeline_mode = #tpu.pipeline_mode<synchronous>, transform_indices = @transform_4, window_bounds = array<i64: 1, 4>}, {pipeline_mode = #tpu.pipeline_mode<synchronous>, transform_indices = @transform_5, window_bounds = array<i64: 4, 8>}, {pipeline_mode = #tpu.pipeline_mode<synchronous>, transform_indices = @transform_6, window_bounds = array<i64: 1, 8>}, {transform_indices = @transform_7, window_bounds = array<i64: 1, 16, 16, 8>}]} {
    %c0 = arith.constant 0 : index
    %c0_0 = arith.constant 0 : index
    %c0_1 = arith.constant 0 : index
    %0 = vector.load %arg5[%c0, %c0_0, %c0_1] : memref<3x3x4xf32, #tpu.memory_space<vmem>>, vector<3x3x4xf32>
    %c0_2 = arith.constant 0 : index
    %c0_3 = arith.constant 0 : index
    %c0_4 = arith.constant 0 : index
    %c0_5 = arith.constant 0 : index
    %1 = vector.load %arg2[%c0_2, %c0_3, %c0_4, %c0_5] : memref<1x16x16x4xf32, #tpu.memory_space<vmem>>, vector<1x16x16x4xf32>
    %2 = vector.shape_cast %1 : vector<1x16x16x4xf32> to vector<16x16x4xf32>
    %c0_6 = arith.constant 0 : index
    %c0_7 = arith.constant 0 : index
    %c0_8 = arith.constant 0 : index
    %c0_9 = arith.constant 0 : index
    %3 = vector.load %arg3[%c0_6, %c0_7, %c0_8, %c0_9] : memref<1x1x16x4xf32, #tpu.memory_space<vmem>>, vector<1x1x16x4xf32>
    %4 = vector.shape_cast %3 : vector<1x1x16x4xf32> to vector<1x16x4xf32>
    %c0_i32 = arith.constant 0 : i32
    %5 = arith.cmpi sgt, %arg1, %c0_i32 : i32
    %6 = arith.extui %5 : i1 to i32
    %7 = arith.sitofp %6 : i32 to f32
    %8 = vector.broadcast %7 : f32 to vector<1x16x4xf32>
    %9 = arith.mulf %4, %8 : vector<1x16x4xf32>
    %c0_10 = arith.constant 0 : index
    %c0_11 = arith.constant 0 : index
    %c0_12 = arith.constant 0 : index
    %c0_13 = arith.constant 0 : index
    %10 = vector.load %arg4[%c0_10, %c0_11, %c0_12, %c0_13] : memref<1x1x16x4xf32, #tpu.memory_space<vmem>>, vector<1x1x16x4xf32>
    %11 = vector.shape_cast %10 : vector<1x1x16x4xf32> to vector<1x16x4xf32>
    %c0_i32_14 = arith.constant 0 : i32
    %12 = arith.cmpi slt, %arg1, %c0_i32_14 : i32
    %13 = arith.extui %12 : i1 to i32
    %14 = arith.sitofp %13 : i32 to f32
    %15 = vector.broadcast %14 : f32 to vector<1x16x4xf32>
    %16 = arith.mulf %11, %15 : vector<1x16x4xf32>
    %17 = vector.extract_strided_slice %2 {offsets = [0, 0, 0], sizes = [15, 16, 4], strides = [1, 1, 1]} : vector<16x16x4xf32> to vector<15x16x4xf32>
    %18 = tpu.concatenate %9, %17 in 0 : vector<1x16x4xf32>, vector<15x16x4xf32> -> vector<16x16x4xf32>
    %19 = vector.extract_strided_slice %2 {offsets = [1, 0, 0], sizes = [15, 16, 4], strides = [1, 1, 1]} : vector<16x16x4xf32> to vector<15x16x4xf32>
    %20 = tpu.concatenate %19, %16 in 0 : vector<15x16x4xf32>, vector<1x16x4xf32> -> vector<16x16x4xf32>
    %21 = vector.extract_strided_slice %0 {offsets = [0, 1, 0], sizes = [1, 1, 4], strides = [1, 1, 1]} : vector<3x3x4xf32> to vector<1x1x4xf32>
    %22 = vector.shape_cast %21 : vector<1x1x4xf32> to vector<4xf32>
    %23 = vector.shape_cast %22 : vector<4xf32> to vector<1x1x4xf32>
    %24 = vector.broadcast %23 : vector<1x1x4xf32> to vector<16x16x4xf32>
    %25 = arith.mulf %18, %24 : vector<16x16x4xf32>
    %26 = vector.extract_strided_slice %0 {offsets = [1, 1, 0], sizes = [1, 1, 4], strides = [1, 1, 1]} : vector<3x3x4xf32> to vector<1x1x4xf32>
    %27 = vector.shape_cast %26 : vector<1x1x4xf32> to vector<4xf32>
    %28 = vector.shape_cast %27 : vector<4xf32> to vector<1x1x4xf32>
    %29 = vector.broadcast %28 : vector<1x1x4xf32> to vector<16x16x4xf32>
    %30 = arith.mulf %2, %29 : vector<16x16x4xf32>
    %31 = arith.addf %25, %30 : vector<16x16x4xf32>
    %32 = vector.extract_strided_slice %0 {offsets = [2, 1, 0], sizes = [1, 1, 4], strides = [1, 1, 1]} : vector<3x3x4xf32> to vector<1x1x4xf32>
    %33 = vector.shape_cast %32 : vector<1x1x4xf32> to vector<4xf32>
    %34 = vector.shape_cast %33 : vector<4xf32> to vector<1x1x4xf32>
    %35 = vector.broadcast %34 : vector<1x1x4xf32> to vector<16x16x4xf32>
    %36 = arith.mulf %20, %35 : vector<16x16x4xf32>
    %37 = arith.addf %31, %36 : vector<16x16x4xf32>
    %38 = vector.extract_strided_slice %0 {offsets = [0, 0, 0], sizes = [1, 1, 4], strides = [1, 1, 1]} : vector<3x3x4xf32> to vector<1x1x4xf32>
    %39 = vector.shape_cast %38 : vector<1x1x4xf32> to vector<4xf32>
    %40 = vector.shape_cast %39 : vector<4xf32> to vector<1x1x4xf32>
    %41 = vector.broadcast %40 : vector<1x1x4xf32> to vector<16x16x4xf32>
    %42 = arith.mulf %18, %41 : vector<16x16x4xf32>
    %43 = vector.extract_strided_slice %0 {offsets = [1, 0, 0], sizes = [1, 1, 4], strides = [1, 1, 1]} : vector<3x3x4xf32> to vector<1x1x4xf32>
    %44 = vector.shape_cast %43 : vector<1x1x4xf32> to vector<4xf32>
    %45 = vector.shape_cast %44 : vector<4xf32> to vector<1x1x4xf32>
    %46 = vector.broadcast %45 : vector<1x1x4xf32> to vector<16x16x4xf32>
    %47 = arith.mulf %2, %46 : vector<16x16x4xf32>
    %48 = arith.addf %42, %47 : vector<16x16x4xf32>
    %49 = vector.extract_strided_slice %0 {offsets = [2, 0, 0], sizes = [1, 1, 4], strides = [1, 1, 1]} : vector<3x3x4xf32> to vector<1x1x4xf32>
    %50 = vector.shape_cast %49 : vector<1x1x4xf32> to vector<4xf32>
    %51 = vector.shape_cast %50 : vector<4xf32> to vector<1x1x4xf32>
    %52 = vector.broadcast %51 : vector<1x1x4xf32> to vector<16x16x4xf32>
    %53 = arith.mulf %20, %52 : vector<16x16x4xf32>
    %54 = arith.addf %48, %53 : vector<16x16x4xf32>
    %55 = vector.extract_strided_slice %0 {offsets = [0, 2, 0], sizes = [1, 1, 4], strides = [1, 1, 1]} : vector<3x3x4xf32> to vector<1x1x4xf32>
    %56 = vector.shape_cast %55 : vector<1x1x4xf32> to vector<4xf32>
    %57 = vector.shape_cast %56 : vector<4xf32> to vector<1x1x4xf32>
    %58 = vector.broadcast %57 : vector<1x1x4xf32> to vector<16x16x4xf32>
    %59 = arith.mulf %18, %58 : vector<16x16x4xf32>
    %60 = vector.extract_strided_slice %0 {offsets = [1, 2, 0], sizes = [1, 1, 4], strides = [1, 1, 1]} : vector<3x3x4xf32> to vector<1x1x4xf32>
    %61 = vector.shape_cast %60 : vector<1x1x4xf32> to vector<4xf32>
    %62 = vector.shape_cast %61 : vector<4xf32> to vector<1x1x4xf32>
    %63 = vector.broadcast %62 : vector<1x1x4xf32> to vector<16x16x4xf32>
    %64 = arith.mulf %2, %63 : vector<16x16x4xf32>
    %65 = arith.addf %59, %64 : vector<16x16x4xf32>
    %66 = vector.extract_strided_slice %0 {offsets = [2, 2, 0], sizes = [1, 1, 4], strides = [1, 1, 1]} : vector<3x3x4xf32> to vector<1x1x4xf32>
    %67 = vector.shape_cast %66 : vector<1x1x4xf32> to vector<4xf32>
    %68 = vector.shape_cast %67 : vector<4xf32> to vector<1x1x4xf32>
    %69 = vector.broadcast %68 : vector<1x1x4xf32> to vector<16x16x4xf32>
    %70 = arith.mulf %20, %69 : vector<16x16x4xf32>
    %71 = arith.addf %65, %70 : vector<16x16x4xf32>
    %cst = arith.constant 0.000000e+00 : f32
    %72 = vector.broadcast %cst : f32 to vector<16x1x4xf32>
    %73 = vector.extract_strided_slice %54 {offsets = [0, 0, 0], sizes = [16, 15, 4], strides = [1, 1, 1]} : vector<16x16x4xf32> to vector<16x15x4xf32>
    %74 = tpu.concatenate %72, %73 in 1 : vector<16x1x4xf32>, vector<16x15x4xf32> -> vector<16x16x4xf32>
    %75 = arith.addf %37, %74 : vector<16x16x4xf32>
    %76 = vector.extract_strided_slice %71 {offsets = [0, 1, 0], sizes = [16, 15, 4], strides = [1, 1, 1]} : vector<16x16x4xf32> to vector<16x15x4xf32>
    %77 = tpu.concatenate %76, %72 in 1 : vector<16x15x4xf32>, vector<16x1x4xf32> -> vector<16x16x4xf32>
    %78 = arith.addf %75, %77 : vector<16x16x4xf32>
    %c0_15 = arith.constant 0 : index
    %c0_16 = arith.constant 0 : index
    %79 = vector.load %arg6[%c0_15, %c0_16] : memref<1x4xf32, #tpu.memory_space<vmem>>, vector<1x4xf32>
    %80 = vector.shape_cast %79 : vector<1x4xf32> to vector<4xf32>
    %81 = vector.shape_cast %80 : vector<4xf32> to vector<1x1x4xf32>
    %82 = vector.broadcast %81 : vector<1x1x4xf32> to vector<16x16x4xf32>
    %83 = arith.addf %78, %82 : vector<16x16x4xf32>
    %cst_17 = arith.constant 0.000000e+00 : f32
    %84 = vector.broadcast %cst_17 : f32 to vector<16x16x4xf32>
    %85 = arith.maximumf %83, %84 : vector<16x16x4xf32>
    %86 = vector.shape_cast %85 : vector<16x16x4xf32> to vector<256x4xf32>
    %87 = arith.truncf %86 : vector<256x4xf32> to vector<256x4xbf16>
    %c0_18 = arith.constant 0 : index
    %c0_19 = arith.constant 0 : index
    %88 = vector.load %arg7[%c0_18, %c0_19] : memref<4x8xbf16, #tpu.memory_space<vmem>>, vector<4x8xbf16>
    %cst_20 = arith.constant dense<0.000000e+00> : vector<256x8xf32>
    %89 = tpu.matmul %87, %88, %cst_20 {dimension_numbers = #tpu.dot_dimension_numbers<[1], [0], [0], [1], [0, 0, 1, 1], [], []>} : vector<256x4xbf16>, vector<4x8xbf16>, vector<256x8xf32> -> vector<256x8xf32>
    %c0_21 = arith.constant 0 : index
    %c0_22 = arith.constant 0 : index
    %90 = vector.load %arg8[%c0_21, %c0_22] : memref<1x8xf32, #tpu.memory_space<vmem>>, vector<1x8xf32>
    %91 = vector.shape_cast %90 : vector<1x8xf32> to vector<8xf32>
    %92 = vector.shape_cast %91 : vector<8xf32> to vector<1x8xf32>
    %93 = vector.broadcast %92 : vector<1x8xf32> to vector<256x8xf32>
    %94 = arith.addf %89, %93 : vector<256x8xf32>
    %cst_23 = arith.constant 0.000000e+00 : f32
    %95 = vector.broadcast %cst_23 : f32 to vector<256x8xf32>
    %96 = arith.maximumf %94, %95 : vector<256x8xf32>
    %97 = vector.shape_cast %96 : vector<256x8xf32> to vector<16x16x8xf32>
    %c0_24 = arith.constant 0 : index
    %c0_25 = arith.constant 0 : index
    %c0_26 = arith.constant 0 : index
    %c0_27 = arith.constant 0 : index
    %98 = vector.load %arg9[%c0_24, %c0_25, %c0_26, %c0_27] : memref<1x16x16x8xf32, #tpu.memory_space<vmem>>, vector<1x16x16x8xf32>
    %99 = vector.shape_cast %98 : vector<1x16x16x8xf32> to vector<16x16x8xf32>
    %100 = vector.shape_cast %97 : vector<16x16x8xf32> to vector<1x16x16x8xf32>
    tpu.vector_store %arg9[%c0_24, %c0_25, %c0_26, %c0_27], %100 {strides = array<i32>} : memref<1x16x16x8xf32, #tpu.memory_space<vmem>>, vector<1x16x16x8xf32>,
    return
  }
  func.func @transform_0(%arg0: i32, %arg1: i32) -> (i32, i32, i32, i32) {
    %c0_i32 = arith.constant 0 : i32
    %c0_i32_0 = arith.constant 0 : i32
    %c0_i32_1 = arith.constant 0 : i32
    return %arg0, %arg1, %c0_i32, %c0_i32_0 : i32, i32, i32, i32
  }
  func.func @transform_1(%arg0: i32, %arg1: i32) -> (i32, i32, i32, i32) {
    %c16_i32 = arith.constant 16 : i32
    %0 = arith.muli %arg1, %c16_i32 : i32
    %c1_i32 = arith.constant 1 : i32
    %1 = arith.subi %0, %c1_i32 : i32
    %c0_i32 = arith.constant 0 : i32
    %2 = arith.maxsi %1, %c0_i32 : i32
    %c0_i32_0 = arith.constant 0 : i32
    %c0_i32_1 = arith.constant 0 : i32
    %c0_i32_2 = arith.constant 0 : i32
    return %arg0, %2, %c0_i32_0, %c0_i32_1 : i32, i32, i32, i32
  }
  func.func @transform_2(%arg0: i32, %arg1: i32) -> (i32, i32, i32, i32) {
    %c1_i32 = arith.constant 1 : i32
    %0 = arith.addi %arg1, %c1_i32 : i32
    %c16_i32 = arith.constant 16 : i32
    %1 = arith.muli %0, %c16_i32 : i32
    %c15_i32 = arith.constant 15 : i32
    %2 = arith.minsi %1, %c15_i32 : i32
    %c0_i32 = arith.constant 0 : i32
    %c0_i32_0 = arith.constant 0 : i32
    %c0_i32_1 = arith.constant 0 : i32
    return %arg0, %2, %c0_i32, %c0_i32_0 : i32, i32, i32, i32
  }
  func.func @transform_3(%arg0: i32, %arg1: i32) -> (i32, i32, i32) {
    %c0_i32 = arith.constant 0 : i32
    %c0_i32_0 = arith.constant 0 : i32
    %c0_i32_1 = arith.constant 0 : i32
    %c0_i32_2 = arith.constant 0 : i32
    return %c0_i32, %c0_i32_0, %c0_i32_1 : i32, i32, i32
  }
  func.func @transform_4(%arg0: i32, %arg1: i32) -> (i32, i32) {
    %c0_i32 = arith.constant 0 : i32
    %c0_i32_0 = arith.constant 0 : i32
    %c0_i32_1 = arith.constant 0 : i32
    return %c0_i32, %c0_i32_0 : i32, i32
  }
  func.func @transform_5(%arg0: i32, %arg1: i32) -> (i32, i32) {
    %c0_i32 = arith.constant 0 : i32
    %c0_i32_0 = arith.constant 0 : i32
    %c0_i32_1 = arith.constant 0 : i32
    return %c0_i32, %c0_i32_0 : i32, i32
  }
  func.func @transform_6(%arg0: i32, %arg1: i32) -> (i32, i32) {
    %c0_i32 = arith.constant 0 : i32
    %c0_i32_0 = arith.constant 0 : i32
    %c0_i32_1 = arith.constant 0 : i32
    return %c0_i32, %c0_i32_0 : i32, i32
  }
  func.func @transform_7(%arg0: i32, %arg1: i32) -> (i32, i32, i32, i32) {
    %c0_i32 = arith.constant 0 : i32
    %c0_i32_0 = arith.constant 0 : i32
    %c0_i32_1 = arith.constant 0 : i32
    return %arg0, %arg1, %c0_i32, %c0_i32_0 : i32, i32, i32, i32
  }
}

</mosaic_0001>

<llo_original>
// kernel: dsconv3x3_pallas.1
$region0: #{dsconv3x3_pallas.1}
  #allocation0 [shape = 'u32[]', space=smem, size = 0x4, offset = 0x4, fixed_abs, tag = 'smem constant byte address 0x4 - core index']
  #allocation1 [shape = 'u32[144,128]{1,0:T(1,128)}', space=vmem, size = 0x12000, scoped, tag = 'internal scratch']
  %s0 = inlined_call_operand.vmem [shape: f32[2,16,16,4], index: 0, kind: input, shape index: {}, may-alias: {0,1,2}]
  %s1 = inlined_call_operand.vmem [shape: f32[2,16,16,4], index: 1, kind: input, shape index: {}, may-alias: {0,1,2}]
  %s2 = inlined_call_operand.vmem [shape: f32[2,16,16,4], index: 2, kind: input, shape index: {}, may-alias: {0,1,2}]
  %s3 = inlined_call_operand.vmem [shape: f32[3,3,4], index: 3, kind: input, shape index: {}]
  %s4 = inlined_call_operand.vmem [shape: f32[1,4], index: 4, kind: input, shape index: {}]
  %s5 = inlined_call_operand.vmem [shape: bf16[4,8], index: 5, kind: input, shape index: {}]
  %s6 = inlined_call_operand.vmem [shape: f32[1,8], index: 6, kind: input, shape index: {}]
  %s7 = inlined_call_operand.vmem [shape: f32[2,16,16,8], index: 7, kind: output, shape index: {}]
  %s8 = sld [smem:[#allocation0]]
  $region61: #{dsconv3x3_pallas.1} parent=0
    _
  %s10 = ssub.s32 1, %s8
  %s11 = scalar_select 0, %s10, %s8
  loop: start=0, step=1, limit=4
  $region2: #{dsconv3x3_pallas.1} parent=0 // loop_pre_header
    _
  $region3: #{dsconv3x3_pallas.1} parent=0 // loop_header
    %s13 = sphi 0, %s17
    %p14 = scmp.ge.s32.totalorder %s13, 4
    %s20 = sphi 0, %s32
    %s21 = sphi 0, %s28
    %s22 = sphi 0, %s20
    %s23 = sphi 0, %s21
    %s24 = sphi 0, %s22
    %s25 = sphi 0, %s23
    %s37 = sphi 0, %s39
    %s40 = sphi 0, %s37
    %s41 = sphi 0, %s40
    %s57 = sphi 0, %s41
    %s73 = sphi 0, %s75
    %s76 = sphi 0, %s73
    %s77 = sphi 0, %s76
    %s93 = sphi 0, %s77
    %s109 = sphi 0, %s111
    %s112 = sphi 0, %s109
    %s113 = sphi 0, %s112
    %s129 = sphi 0, %s113
    %s133 = sphi 0, %s133
    %s135 = sphi 0, %s133
    %s136 = sphi 0, %s135
    %s150 = sphi 0, %s136
    %s154 = sphi 0, %s154
    %s156 = sphi 0, %s154
    %s157 = sphi 0, %s156
    %s171 = sphi 0, %s157
    %s175 = sphi 0, %s175
    %s177 = sphi 0, %s175
    %s178 = sphi 0, %s177
    %s192 = sphi 0, %s178
    %s196 = sphi 0, %s196
    %s198 = sphi 0, %s196
    %s199 = sphi 0, %s198
    %s213 = sphi 0, %s199
    %s221 = sphi 0, %s223
    %s224 = sphi 0, %s221
    %s225 = sphi 0, %s224
    %s241 = sphi 0, %s225
  $region4: #{dsconv3x3_pallas.1} parent=0 // loop_header_branch
    %16 = sbr.rel (%p14) target = $region8
  $region5: #{dsconv3x3_pallas.1} parent=0 // loop_body
    %s18 = ssub.s32 %s13, 1
    %s19 = ssub.s32 %s13, 2
    %s26 = sadd.s32 1, %s21
    %p27 = scmp.ge.s32.totalorder %s26, 1
    %s28 = scalar_select %p27, 0, %s26
    %s29 = sadd.s32 1, %s20
    %s30 = scalar_select %p27, %s29, %s20
    %p31 = scmp.ge.s32.totalorder %s30, 2
    %s32 = scalar_select %p31, 0, %s30
    %s33 = ssub.s32 %s20, %s32
    %s34 = ssub.s32 %s21, %s28
    %s35 = sor.u32 %s33, %s34
    %p36 = scmp.eq.s32.totalorder %s35, 0
    %s38 = sadd.s32 %s37, 1
    %s39 = scalar_select %p36, %s37, %s38
    %p42 = pneg %p36
    %p43 = scmp.eq.s32.totalorder %s13, 1
    %p44 = por %p42, %p43
    %p45 = scmp.ne.s32.totalorder %s37, %s40
    %p46 = scmp.eq.s32.totalorder %s13, 0
    %p47 = por %p45, %p46
    %p48 = scmp.ne.s32.totalorder %s37, %s40
    %p49 = scmp.eq.s32.totalorder %s18, 1
    %p50 = por %p48, %p49
    %p51 = scmp.ne.s32.totalorder %s40, %s41
    %p52 = scmp.eq.s32.totalorder %s18, 0
    %p53 = por %p51, %p52
    %p54 = scmp.ne.s32.totalorder %s40, %s41
    %p55 = scmp.eq.s32.totalorder %s19, 1
    %p56 = por %p54, %p55
    %p58 = scmp.ne.s32.totalorder %s41, %s57
    %p59 = scmp.eq.s32.totalorder %s19, 0
    %p60 = por %p58, %p59
    %s61 = smul.u32 %s21, 16
    %s62 = ssub.s32 %s61, 1
    %p63 = scmp.gt.s32.totalorder %s62, 0
    %s64 = scalar_select %p63, %s62, 0
    %s65 = smul.u32 %s28, 16
    %s66 = ssub.s32 %s65, 1
    %p67 = scmp.gt.s32.totalorder %s66, 0
    %s68 = scalar_select %p67, %s66, 0
    %s69 = ssub.s32 %s20, %s32
    %s70 = ssub.s32 %s64, %s68
    %s71 = sor.u32 %s69, %s70
    %p72 = scmp.eq.s32.totalorder %s71, 0
    %s74 = sadd.s32 %s73, 1
    %s75 = scalar_select %p72, %s73, %s74
    %p78 = pneg %p72
    %p79 = scmp.eq.s32.totalorder %s13, 1
    %p80 = por %p78, %p79
    %p81 = scmp.ne.s32.totalorder %s73, %s76
    %p82 = scmp.eq.s32.totalorder %s13, 0
    %p83 = por %p81, %p82
    %p84 = scmp.ne.s32.totalorder %s73, %s76
    %p85 = scmp.eq.s32.totalorder %s18, 1
    %p86 = por %p84, %p85
    %p87 = scmp.ne.s32.totalorder %s76, %s77
    %p88 = scmp.eq.s32.totalorder %s18, 0
    %p89 = por %p87, %p88
    %p90 = scmp.ne.s32.totalorder %s76, %s77
    %p91 = scmp.eq.s32.totalorder %s19, 1
    %p92 = por %p90, %p91
    %p94 = scmp.ne.s32.totalorder %s77, %s93
    %p95 = scmp.eq.s32.totalorder %s19, 0
    %p96 = por %p94, %p95
    %s97 = sadd.s32 %s21, 1
    %s98 = smul.u32 %s97, 16
    %p99 = scmp.lt.s32.totalorder %s98, 15
    %s100 = scalar_select %p99, %s98, 15
    %s101 = sadd.s32 %s28, 1
    %s102 = smul.u32 %s101, 16
    %p103 = scmp.lt.s32.totalorder %s102, 15
    %s104 = scalar_select %p103, %s102, 15
    %s105 = ssub.s32 %s20, %s32
    %s106 = ssub.s32 %s100, %s104
    %s107 = sor.u32 %s105, %s106
    %p108 = scmp.eq.s32.totalorder %s107, 0
    %s110 = sadd.s32 %s109, 1
    %s111 = scalar_select %p108, %s109, %s110
    %p114 = pneg %p108
    %p115 = scmp.eq.s32.totalorder %s13, 1
    %p116 = por %p114, %p115
    %p117 = scmp.ne.s32.totalorder %s109, %s112
    %p118 = scmp.eq.s32.totalorder %s13, 0
    %p119 = por %p117, %p118
    %p120 = scmp.ne.s32.totalorder %s109, %s112
    %p121 = scmp.eq.s32.totalorder %s18, 1
    %p122 = por %p120, %p121
    %p123 = scmp.ne.s32.totalorder %s112, %s113
    %p124 = scmp.eq.s32.totalorder %s18, 0
    %p125 = por %p123, %p124
    %p126 = scmp.ne.s32.totalorder %s112, %s113
    %p127 = scmp.eq.s32.totalorder %s19, 1
    %p128 = por %p126, %p127
    %p130 = scmp.ne.s32.totalorder %s113, %s129
    %p131 = scmp.eq.s32.totalorder %s19, 0
    %p132 = por %p130, %p131
    %s134 = sadd.s32 %s133, 1
    %p137 = scmp.eq.s32.totalorder %s13, 1
    %p138 = scmp.ne.s32.totalorder %s133, %s135
    %p139 = scmp.eq.s32.totalorder %s13, 0
    %p140 = por %p138, %p139
    %p141 = scmp.ne.s32.totalorder %s133, %s135
    %p142 = scmp.eq.s32.totalorder %s18, 1
    %p143 = por %p141, %p142
    %p144 = scmp.ne.s32.totalorder %s135, %s136
    %p145 = scmp.eq.s32.totalorder %s18, 0
    %p146 = por %p144, %p145
    %p147 = scmp.ne.s32.totalorder %s135, %s136
    %p148 = scmp.eq.s32.totalorder %s19, 1
    %p149 = por %p147, %p148
    %p151 = scmp.ne.s32.totalorder %s136, %s150
    %p152 = scmp.eq.s32.totalorder %s19, 0
    %p153 = por %p151, %p152
    %s155 = sadd.s32 %s154, 1
    %p158 = scmp.eq.s32.totalorder %s13, 1
    %p159 = scmp.ne.s32.totalorder %s154, %s156
    %p160 = scmp.eq.s32.totalorder %s13, 0
    %p161 = por %p159, %p160
    %p162 = scmp.ne.s32.totalorder %s154, %s156
    %p163 = scmp.eq.s32.totalorder %s18, 1
    %p164 = por %p162, %p163
    %p165 = scmp.ne.s32.totalorder %s156, %s157
    %p166 = scmp.eq.s32.totalorder %s18, 0
    %p167 = por %p165, %p166
    %p168 = scmp.ne.s32.totalorder %s156, %s157
    %p169 = scmp.eq.s32.totalorder %s19, 1
    %p170 = por %p168, %p169
    %p172 = scmp.ne.s32.totalorder %s157, %s171
    %p173 = scmp.eq.s32.totalorder %s19, 0
    %p174 = por %p172, %p173
    %s176 = sadd.s32 %s175, 1
    %p179 = scmp.eq.s32.totalorder %s13, 1
    %p180 = scmp.ne.s32.totalorder %s175, %s177
    %p181 = scmp.eq.s32.totalorder %s13, 0
    %p182 = por %p180, %p181
    %p183 = scmp.ne.s32.totalorder %s175, %s177
    %p184 = scmp.eq.s32.totalorder %s18, 1
    %p185 = por %p183, %p184
    %p186 = scmp.ne.s32.totalorder %s177, %s178
    %p187 = scmp.eq.s32.totalorder %s18, 0
    %p188 = por %p186, %p187
    %p189 = scmp.ne.s32.totalorder %s177, %s178
    %p190 = scmp.eq.s32.totalorder %s19, 1
    %p191 = por %p189, %p190
    %p193 = scmp.ne.s32.totalorder %s178, %s192
    %p194 = scmp.eq.s32.totalorder %s19, 0
    %p195 = por %p193, %p194
    %s197 = sadd.s32 %s196, 1
    %p200 = scmp.eq.s32.totalorder %s13, 1
    %p201 = scmp.ne.s32.totalorder %s196, %s198
    %p202 = scmp.eq.s32.totalorder %s13, 0
    %p203 = por %p201, %p202
    %p204 = scmp.ne.s32.totalorder %s196, %s198
    %p205 = scmp.eq.s32.totalorder %s18, 1
    %p206 = por %p204, %p205
    %p207 = scmp.ne.s32.totalorder %s198, %s199
    %p208 = scmp.eq.s32.totalorder %s18, 0
    %p209 = por %p207, %p208
    %p210 = scmp.ne.s32.totalorder %s198, %s199
    %p211 = scmp.eq.s32.totalorder %s19, 1
    %p212 = por %p210, %p211
    %p214 = scmp.ne.s32.totalorder %s199, %s213
    %p215 = scmp.eq.s32.totalorder %s19, 0
    %p216 = por %p214, %p215
    %s217 = ssub.s32 %s20, %s32
    %s218 = ssub.s32 %s21, %s28
    %s219 = sor.u32 %s217, %s218
    %p220 = scmp.eq.s32.totalorder %s219, 0
    %s222 = sadd.s32 %s221, 1
    %s223 = scalar_select %p220, %s221, %s222
    %p226 = pneg %p220
    %p227 = scmp.eq.s32.totalorder %s13, 1
    %p228 = por %p226, %p227
    %p229 = scmp.ne.s32.totalorder %s221, %s224
    %p230 = scmp.eq.s32.totalorder %s13, 0
    %p231 = por %p229, %p230
    %p232 = scmp.ne.s32.totalorder %s221, %s224
    %p233 = scmp.eq.s32.totalorder %s18, 1
    %p234 = por %p232, %p233
    %p235 = scmp.ne.s32.totalorder %s224, %s225
    %p236 = scmp.eq.s32.totalorder %s18, 0
    %p237 = por %p235, %p236
    %p238 = scmp.ne.s32.totalorder %s224, %s225
    %p239 = scmp.eq.s32.totalorder %s19, 1
    %p240 = por %p238, %p239
    %p242 = scmp.ne.s32.totalorder %s225, %s241
    %p243 = scmp.eq.s32.totalorder %s19, 0
    %p244 = por %p242, %p243
    %p245 = scmp.le.s32.totalorder 1, %s13
    %p246 = scmp.lt.s32.totalorder %s13, 3
    %p247 = pnand %p245, %p246
    %p248 = pneg %p247
    // Predicated region
    $region9: #{dsconv3x3_pallas.1} parent=5 // pred_check
      _
    $region10: #{dsconv3x3_pallas.1} parent=5 // pred_check_branch
      %250 = sbr.rel (%p247) target = $region12
    $region11: #{dsconv3x3_pallas.1} parent=5 // pred_region
      %s251 = ssub.s32 %s13, 1
      // Predicated region
      $region13: #{dsconv3x3_pallas.1} parent=11 // pred_check
        %p252 = pneg %p146
      $region14: #{dsconv3x3_pallas.1} parent=11 // pred_check_branch
        %254 = sbr.rel (%p252) target = $region16
      $region15: #{dsconv3x3_pallas.1} parent=11 // pred_region
        _
      $region16: #{dsconv3x3_pallas.1} parent=11 // pred_fallthru
        _
      // Predicated region
      $region17: #{dsconv3x3_pallas.1} parent=11 // pred_check
        %p255 = pneg %p167
      $region18: #{dsconv3x3_pallas.1} parent=11 // pred_check_branch
        %257 = sbr.rel (%p255) target = $region20
      $region19: #{dsconv3x3_pallas.1} parent=11 // pred_region
        _
      $region20: #{dsconv3x3_pallas.1} parent=11 // pred_fallthru
        _
      // Predicated region
      $region21: #{dsconv3x3_pallas.1} parent=11 // pred_check
        %p258 = pneg %p188
      $region22: #{dsconv3x3_pallas.1} parent=11 // pred_check_branch
        %260 = sbr.rel (%p258) target = $region24
      $region23: #{dsconv3x3_pallas.1} parent=11 // pred_region
        _
      $region24: #{dsconv3x3_pallas.1} parent=11 // pred_fallthru
        _
      // Predicated region
      $region25: #{dsconv3x3_pallas.1} parent=11 // pred_check
        %p261 = pneg %p209
      $region26: #{dsconv3x3_pallas.1} parent=11 // pred_check_branch
        %263 = sbr.rel (%p261) target = $region28
      $region27: #{dsconv3x3_pallas.1} parent=11 // pred_region
        _
      $region28: #{dsconv3x3_pallas.1} parent=11 // pred_fallthru
        _
    $region12: #{dsconv3x3_pallas.1} parent=5 // pred_fallthru
      _
    %p264 = scmp.lt.s32.totalorder %s13, 2
    // Predicated region
    $region29: #{dsconv3x3_pallas.1} parent=5 // pred_check
      %p265 = pneg %p264
    $region30: #{dsconv3x3_pallas.1} parent=5 // pred_check_branch
      %267 = sbr.rel (%p265) target = $region32
    $region31: #{dsconv3x3_pallas.1} parent=5 // pred_region
      // Predicated region
      $region33: #{dsconv3x3_pallas.1} parent=31 // pred_check
        %p268 = pneg %p47
      $region34: #{dsconv3x3_pallas.1} parent=31 // pred_check_branch
        %270 = sbr.rel (%p268) target = $region36
      $region35: #{dsconv3x3_pallas.1} parent=31 // pred_region
        %s271 = smul.u32 16, %s21
        %p272 = scmp.lt.s32.totalorder %s20, 1
        %s273 = scalar_select %p272, %s20, 1
        %p274 = scmp.lt.s32.totalorder %s271, 15
        %s275 = scalar_select %p274, %s271, 15
        %s276 = smul.addr %s275, 2
        %s277 = smul.addr %s273, 32
        %s278 = sadd.s32 %s276, %s277
        %s279 = smul.addr %s278, 8
        %s280 = scalar_lea.vmem %s0, %s279
        %s281 = smul.u32 16, %s21
      $region36: #{dsconv3x3_pallas.1} parent=31 // pred_fallthru
        _
      // Predicated region
      $region37: #{dsconv3x3_pallas.1} parent=31 // pred_check
        %p282 = pneg %p83
      $region38: #{dsconv3x3_pallas.1} parent=31 // pred_check_branch
        %284 = sbr.rel (%p282) target = $region40
      $region39: #{dsconv3x3_pallas.1} parent=31 // pred_region
        %s285 = smul.u32 %s21, 16
        %s286 = ssub.s32 %s285, 1
        %p287 = scmp.gt.s32.totalorder %s286, 0
        %s288 = scalar_select %p287, %s286, 0
        %p289 = scmp.lt.s32.totalorder %s20, 1
        %s290 = scalar_select %p289, %s20, 1
        %p291 = scmp.lt.s32.totalorder %s288, 15
        %s292 = scalar_select %p291, %s288, 15
        %s293 = smul.addr %s292, 2
        %s294 = smul.addr %s290, 32
        %s295 = sadd.s32 %s293, %s294
        %s296 = smul.addr %s295, 8
        %s297 = scalar_lea.vmem %s1, %s296
        %s298 = smul.u32 %s21, 16
        %s299 = ssub.s32 %s298, 1
        %p300 = scmp.gt.s32.totalorder %s299, 0
        %s301 = scalar_select %p300, %s299, 0
      $region40: #{dsconv3x3_pallas.1} parent=31 // pred_fallthru
        _
      // Predicated region
      $region41: #{dsconv3x3_pallas.1} parent=31 // pred_check
        %p302 = pneg %p119
      $region42: #{dsconv3x3_pallas.1} parent=31 // pred_check_branch
        %304 = sbr.rel (%p302) target = $region44
      $region43: #{dsconv3x3_pallas.1} parent=31 // pred_region
        %s305 = sadd.s32 %s21, 1
        %s306 = smul.u32 %s305, 16
        %p307 = scmp.lt.s32.totalorder %s306, 15
        %s308 = scalar_select %p307, %s306, 15
        %p309 = scmp.lt.s32.totalorder %s20, 1
        %s310 = scalar_select %p309, %s20, 1
        %p311 = scmp.lt.s32.totalorder %s308, 15
        %s312 = scalar_select %p311, %s308, 15
        %s313 = smul.addr %s312, 2
        %s314 = smul.addr %s310, 32
        %s315 = sadd.s32 %s313, %s314
        %s316 = smul.addr %s315, 8
        %s317 = scalar_lea.vmem %s2, %s316
        %s318 = sadd.s32 %s21, 1
        %s319 = smul.u32 %s318, 16
        %p320 = scmp.lt.s32.totalorder %s319, 15
        %s321 = scalar_select %p320, %s319, 15
      $region44: #{dsconv3x3_pallas.1} parent=31 // pred_fallthru
        _
    $region32: #{dsconv3x3_pallas.1} parent=5 // pred_fallthru
      _
    %p322 = scmp.le.s32.totalorder 1, %s13
    %p323 = scmp.lt.s32.totalorder %s13, 3
    %p324 = pnand %p322, %p323
    %p325 = pneg %p324
    // Predicated region
    $region45: #{dsconv3x3_pallas.1} parent=5 // pred_check
      _
    $region46: #{dsconv3x3_pallas.1} parent=5 // pred_check_branch
      %327 = sbr.rel (%p324) target = $region48
    $region47: #{dsconv3x3_pallas.1} parent=5 // pred_region
      %s328 = ssub.s32 %s13, 1
      %s329 = smul.u32 16, %s23
      %p330 = scmp.lt.s32.totalorder %s22, 1
      %s331 = scalar_select %p330, %s22, 1
      %p332 = scmp.lt.s32.totalorder %s329, 15
      %s333 = scalar_select %p332, %s329, 15
      %s334 = smul.addr %s333, 2
      %s335 = smul.addr %s331, 32
      %s336 = sadd.s32 %s334, %s335
      %s337 = smul.addr %s336, 8
      %s338 = scalar_lea.vmem %s0, %s337
      %p339 = pneg %p53
      %p340 = pneg %p50
      %s341 = smul.u32 %s23, 16
      %s342 = ssub.s32 %s341, 1
      %p343 = scmp.gt.s32.totalorder %s342, 0
      %s344 = scalar_select %p343, %s342, 0
      %p345 = scmp.lt.s32.totalorder %s22, 1
      %s346 = scalar_select %p345, %s22, 1
      %p347 = scmp.lt.s32.totalorder %s344, 15
      %s348 = scalar_select %p347, %s344, 15
      %s349 = smul.addr %s348, 2
      %s350 = smul.addr %s346, 32
      %s351 = sadd.s32 %s349, %s350
      %s352 = smul.addr %s351, 8
      %s353 = scalar_lea.vmem %s1, %s352
      %p354 = pneg %p89
      %p355 = pneg %p86
      %s356 = sadd.s32 %s23, 1
      %s357 = smul.u32 %s356, 16
      %p358 = scmp.lt.s32.totalorder %s357, 15
      %s359 = scalar_select %p358, %s357, 15
      %p360 = scmp.lt.s32.totalorder %s22, 1
      %s361 = scalar_select %p360, %s22, 1
      %p362 = scmp.lt.s32.totalorder %s359, 15
      %s363 = scalar_select %p362, %s359, 15
      %s364 = smul.addr %s363, 2
      %s365 = smul.addr %s361, 32
      %s366 = sadd.s32 %s364, %s365
      %s367 = smul.addr %s366, 8
      %s368 = scalar_lea.vmem %s2, %s367
      %p369 = pneg %p125
      %p370 = pneg %p122
      %p371 = pneg %p146
      %p372 = pneg %p143
      %p373 = pneg %p167
      %p374 = pneg %p164
      %p375 = pneg %p188
      %p376 = pneg %p185
      %p377 = pneg %p209
      %p378 = pneg %p206
      %p379 = pneg %p237
      %p380 = pneg %p234
      %s381 = smul.u32 16, %s23
      %p382 = scmp.lt.s32.totalorder %s22, 1
      %s383 = scalar_select %p382, %s22, 1
      %p384 = scmp.lt.s32.totalorder %s381, 15
      %s385 = scalar_select %p384, %s381, 15
      %s386 = smul.addr %s385, 2
      %s387 = smul.addr %s383, 32
      %s388 = sadd.s32 %s386, %s387
      %s389 = smul.addr %s388, 8
      %s390 = scalar_lea.vmem %s7, %s389
      %s391 = smul.u32 16, %s23
      %p392 = scmp.lt.s32.totalorder %s22, 1
      %s393 = scalar_select %p392, %s22, 1
      %p394 = scmp.lt.s32.totalorder %s391, 15
      %s395 = scalar_select %p394, %s391, 15
      %s396 = smul.addr %s395, 2
      %s397 = smul.addr %s393, 32
      %s398 = sadd.s32 %s396, %s397
      %s399 = smul.addr %s398, 8
      %s400 = scalar_lea.vmem %s0, %s399
      %s401 = smul.u32 16, %s23
      %s402 = smul.u32 %s23, 16
      %s403 = ssub.s32 %s402, 1
      %p404 = scmp.gt.s32.totalorder %s403, 0
      %s405 = scalar_select %p404, %s403, 0
      %p406 = scmp.lt.s32.totalorder %s22, 1
      %s407 = scalar_select %p406, %s22, 1
      %p408 = scmp.lt.s32.totalorder %s405, 15
      %s409 = scalar_select %p408, %s405, 15
      %s410 = smul.addr %s409, 2
      %s411 = smul.addr %s407, 32
      %s412 = sadd.s32 %s410, %s411
      %s413 = smul.addr %s412, 8
      %s414 = scalar_lea.vmem %s1, %s413
      %s415 = smul.u32 %s23, 16
      %s416 = ssub.s32 %s415, 1
      %p417 = scmp.gt.s32.totalorder %s416, 0
      %s418 = scalar_select %p417, %s416, 0
      %s419 = sadd.s32 %s23, 1
      %s420 = smul.u32 %s419, 16
      %p421 = scmp.lt.s32.totalorder %s420, 15
      %s422 = scalar_select %p421, %s420, 15
      %p423 = scmp.lt.s32.totalorder %s22, 1
      %s424 = scalar_select %p423, %s22, 1
      %p425 = scmp.lt.s32.totalorder %s422, 15
      %s426 = scalar_select %p425, %s422, 15
      %s427 = smul.addr %s426, 2
      %s428 = smul.addr %s424, 32
      %s429 = sadd.s32 %s427, %s428
      %s430 = smul.addr %s429, 8
      %s431 = scalar_lea.vmem %s2, %s430
      %s432 = sadd.s32 %s23, 1
      %s433 = smul.u32 %s432, 16
      %p434 = scmp.lt.s32.totalorder %s433, 15
      %s435 = scalar_select %p434, %s433, 15
      %s436 = smul.u32 16, %s23
      %p437 = scmp.lt.s32.totalorder %s22, 1
      %s438 = scalar_select %p437, %s22, 1
      %p439 = scmp.lt.s32.totalorder %s436, 15
      %s440 = scalar_select %p439, %s436, 15
      %s441 = smul.addr %s440, 2
      %s442 = smul.addr %s438, 32
      %s443 = sadd.s32 %s441, %s442
      %s444 = smul.addr %s443, 8
      %s445 = scalar_lea.vmem %s7, %s444
      %s446 = smul.u32 16, %s23
      %v448 = vld [vmem:[%s3] sm:$0x7]
      %v449 = vld [vmem:[%s3 + $0x4] sm:$0x7]
      %v450 = vld [vmem:[%s3 + $0x8] sm:$0x7]
      %v451 = vld [vmem:[%s400] sm:$0xff]
      %v452 = vld [vmem:[%s400 + $0x8] sm:$0xff]
      %v453 = vld [vmem:[%s400 + $0x10] sm:$0xff]
      %v454 = vld [vmem:[%s400 + $0x18] sm:$0xff]
      %v455 = vld [vmem:[%s400 + $0x20] sm:$0xff]
      %v456 = vld [vmem:[%s400 + $0x28] sm:$0xff]
      %v457 = vld [vmem:[%s400 + $0x30] sm:$0xff]
      %v458 = vld [vmem:[%s400 + $0x38] sm:$0xff]
      %v459 = vld [vmem:[%s400 + $0x40] sm:$0xff]
      %v460 = vld [vmem:[%s400 + $0x48] sm:$0xff]
      %v461 = vld [vmem:[%s400 + $0x50] sm:$0xff]
      %v462 = vld [vmem:[%s400 + $0x58] sm:$0xff]
      %v463 = vld [vmem:[%s400 + $0x60] sm:$0xff]
      %v464 = vld [vmem:[%s400 + $0x68] sm:$0xff]
      %v465 = vld [vmem:[%s400 + $0x70] sm:$0xff]
      %v466 = vld [vmem:[%s400 + $0x78] sm:$0xff]
      %v467 = vld [vmem:[%s400 + $0x80] sm:$0xff]
      %v468 = vld [vmem:[%s400 + $0x88] sm:$0xff]
      %v469 = vld [vmem:[%s400 + $0x90] sm:$0xff]
      %v470 = vld [vmem:[%s400 + $0x98] sm:$0xff]
      %v471 = vld [vmem:[%s400 + $0xa0] sm:$0xff]
      %v472 = vld [vmem:[%s400 + $0xa8] sm:$0xff]
      %v473 = vld [vmem:[%s400 + $0xb0] sm:$0xff]
      %v474 = vld [vmem:[%s400 + $0xb8] sm:$0xff]
      %v475 = vld [vmem:[%s400 + $0xc0] sm:$0xff]
      %v476 = vld [vmem:[%s400 + $0xc8] sm:$0xff]
      %v477 = vld [vmem:[%s400 + $0xd0] sm:$0xff]
      %v478 = vld [vmem:[%s400 + $0xd8] sm:$0xff]
      %v479 = vld [vmem:[%s400 + $0xe0] sm:$0xff]
      %v480 = vld [vmem:[%s400 + $0xe8] sm:$0xff]
      %v481 = vld [vmem:[%s400 + $0xf0] sm:$0xff]
      %v482 = vld [vmem:[%s400 + $0xf8] sm:$0xff]
      %v483 = vld [vmem:[%s414] sm:$0xff]
      %v484 = vld [vmem:[%s414 + $0x8] sm:$0xff]
      %p485 = scmp.gt.s32.totalorder %s23, 0
      %s486 = scalar_select %p485, 1, 0
      %s487 = scvt.s32.f32 %s486
      %v488 = vstv %s487
      %v489 = vmul.f32 %v483, %v488
      %v490 = vmul.f32 %v484, %v488
      %v491 = vld [vmem:[%s431] sm:$0xff]
      %v492 = vld [vmem:[%s431 + $0x8] sm:$0xff]
      %p493 = scmp.lt.s32.totalorder %s23, 0
      %s494 = scalar_select %p493, 1, 0
      %s495 = scvt.s32.f32 %s494
      %v496 = vstv %s495
      %v497 = vmul.f32 %v491, %v496
      %v498 = vmul.f32 %v492, %v496
      %v499 = vlaneseq
      %v500 = vshrl.u32 %v499, 7
      %v501 = vsub.s32 1, %v500
      %v502 = vrot.slane %v448, %v501
      %v503 = vmul.f32 %v489, %v502
      %v504 = vmul.f32 %v490, %v502
      %v505 = vmul.f32 %v451, %v502
      %v506 = vmul.f32 %v452, %v502
      %v507 = vmul.f32 %v453, %v502
      %v508 = vmul.f32 %v454, %v502
      %v509 = vmul.f32 %v455, %v502
      %v510 = vmul.f32 %v456, %v502
      %v511 = vmul.f32 %v457, %v502
      %v512 = vmul.f32 %v458, %v502
      %v513 = vmul.f32 %v459, %v502
      %v514 = vmul.f32 %v460, %v502
      %v515 = vmul.f32 %v461, %v502
      %v516 = vmul.f32 %v462, %v502
      %v517 = vmul.f32 %v463, %v502
      %v518 = vmul.f32 %v464, %v502
      %v519 = vmul.f32 %v465, %v502
      %v520 = vmul.f32 %v466, %v502
      %v521 = vmul.f32 %v467, %v502
      %v522 = vmul.f32 %v468, %v502
      %v523 = vmul.f32 %v469, %v502
      %v524 = vmul.f32 %v470, %v502
      %v525 = vmul.f32 %v471, %v502
      %v526 = vmul.f32 %v472, %v502
      %v527 = vmul.f32 %v473, %v502
      %v528 = vmul.f32 %v474, %v502
      %v529 = vmul.f32 %v475, %v502
      %v530 = vmul.f32 %v476, %v502
      %v531 = vmul.f32 %v477, %v502
      %v532 = vmul.f32 %v478, %v502
      %v533 = vmul.f32 %v479, %v502
      %v534 = vmul.f32 %v480, %v502
      %v535 = vlaneseq
      %v536 = vshrl.u32 %v535, 7
      %v537 = vsub.s32 1, %v536
      %v538 = vrot.slane %v449, %v537
      %v539 = vmul.f32 %v451, %v538
      %v540 = vmul.f32 %v452, %v538
      %v541 = vmul.f32 %v453, %v538
      %v542 = vmul.f32 %v454, %v538
      %v543 = vmul.f32 %v455, %v538
      %v544 = vmul.f32 %v456, %v538
      %v545 = vmul.f32 %v457, %v538
      %v546 = vmul.f32 %v458, %v538
      %v547 = vmul.f32 %v459, %v538
      %v548 = vmul.f32 %v460, %v538
      %v549 = vmul.f32 %v461, %v538
      %v550 = vmul.f32 %v462, %v538
      %v551 = vmul.f32 %v463, %v538
      %v552 = vmul.f32 %v464, %v538
      %v553 = vmul.f32 %v465, %v538
      %v554 = vmul.f32 %v466, %v538
      %v555 = vmul.f32 %v467, %v538
      %v556 = vmul.f32 %v468, %v538
      %v557 = vmul.f32 %v469, %v538
      %v558 = vmul.f32 %v470, %v538
      %v559 = vmul.f32 %v471, %v538
      %v560 = vmul.f32 %v472, %v538
      %v561 = vmul.f32 %v473, %v538
      %v562 = vmul.f32 %v474, %v538
      %v563 = vmul.f32 %v475, %v538
      %v564 = vmul.f32 %v476, %v538
      %v565 = vmul.f32 %v477, %v538
      %v566 = vmul.f32 %v478, %v538
      %v567 = vmul.f32 %v479, %v538
      %v568 = vmul.f32 %v480, %v538
      %v569 = vmul.f32 %v481, %v538
      %v570 = vmul.f32 %v482, %v538
      %v571 = vadd.f32 %v503, %v539
      %v572 = vadd.f32 %v504, %v540
      %v573 = vadd.f32 %v505, %v541
      %v574 = vadd.f32 %v506, %v542
      %v575 = vadd.f32 %v507, %v543
      %v576 = vadd.f32 %v508, %v544
      %v577 = vadd.f32 %v509, %v545
      %v578 = vadd.f32 %v510, %v546
      %v579 = vadd.f32 %v511, %v547
      %v580 = vadd.f32 %v512, %v548
      %v581 = vadd.f32 %v513, %v549
      %v582 = vadd.f32 %v514, %v550
      %v583 = vadd.f32 %v515, %v551
      %v584 = vadd.f32 %v516, %v552
      %v585 = vadd.f32 %v517, %v553
      %v586 = vadd.f32 %v518, %v554
      %v587 = vadd.f32 %v519, %v555
      %v588 = vadd.f32 %v520, %v556
      %v589 = vadd.f32 %v521, %v557
      %v590 = vadd.f32 %v522, %v558
      %v591 = vadd.f32 %v523, %v559
      %v592 = vadd.f32 %v524, %v560
      %v593 = vadd.f32 %v525, %v561
      %v594 = vadd.f32 %v526, %v562
      %v595 = vadd.f32 %v527, %v563
      %v596 = vadd.f32 %v528, %v564
      %v597 = vadd.f32 %v529, %v565
      %v598 = vadd.f32 %v530, %v566
      %v599 = vadd.f32 %v531, %v567
      %v600 = vadd.f32 %v532, %v568
      %v601 = vadd.f32 %v533, %v569
      %v602 = vadd.f32 %v534, %v570
      %v603 = vlaneseq
      %v604 = vshrl.u32 %v603, 7
      %v605 = vsub.s32 1, %v604
      %v606 = vrot.slane %v450, %v605
      %v607 = vmul.f32 %v453, %v606
      %v608 = vmul.f32 %v454, %v606
      %v609 = vmul.f32 %v455, %v606
      %v610 = vmul.f32 %v456, %v606
      %v611 = vmul.f32 %v457, %v606
      %v612 = vmul.f32 %v458, %v606
      %v613 = vmul.f32 %v459, %v606
      %v614 = vmul.f32 %v460, %v606
      %v615 = vmul.f32 %v461, %v606
      %v616 = vmul.f32 %v462, %v606
      %v617 = vmul.f32 %v463, %v606
      %v618 = vmul.f32 %v464, %v606
      %v619 = vmul.f32 %v465, %v606
      %v620 = vmul.f32 %v466, %v606
      %v621 = vmul.f32 %v467, %v606
      %v622 = vmul.f32 %v468, %v606
      %v623 = vmul.f32 %v469, %v606
      %v624 = vmul.f32 %v470, %v606
      %v625 = vmul.f32 %v471, %v606
      %v626 = vmul.f32 %v472, %v606
      %v627 = vmul.f32 %v473, %v606
      %v628 = vmul.f32 %v474, %v606
      %v629 = vmul.f32 %v475, %v606
      %v630 = vmul.f32 %v476, %v606
      %v631 = vmul.f32 %v477, %v606
      %v632 = vmul.f32 %v478, %v606
      %v633 = vmul.f32 %v479, %v606
      %v634 = vmul.f32 %v480, %v606
      %v635 = vmul.f32 %v481, %v606
      %v636 = vmul.f32 %v482, %v606
      %v637 = vmul.f32 %v497, %v606
      %v638 = vmul.f32 %v498, %v606
      %v639 = vadd.f32 %v571, %v607
      %v640 = vadd.f32 %v572, %v608
      %v641 = vadd.f32 %v573, %v609
      %v642 = vadd.f32 %v574, %v610
      %v643 = vadd.f32 %v575, %v611
      %v644 = vadd.f32 %v576, %v612
      %v645 = vadd.f32 %v577, %v613
      %v646 = vadd.f32 %v578, %v614
      %v647 = vadd.f32 %v579, %v615
      %v648 = vadd.f32 %v580, %v616
      %v649 = vadd.f32 %v581, %v617
      %v650 = vadd.f32 %v582, %v618
      %v651 = vadd.f32 %v583, %v619
      %v652 = vadd.f32 %v584, %v620
      %v653 = vadd.f32 %v585, %v621
      %v654 = vadd.f32 %v586, %v622
      %v655 = vadd.f32 %v587, %v623
      %v656 = vadd.f32 %v588, %v624
      %v657 = vadd.f32 %v589, %v625
      %v658 = vadd.f32 %v590, %v626
      %v659 = vadd.f32 %v591, %v627
      %v660 = vadd.f32 %v592, %v628
      %v661 = vadd.f32 %v593, %v629
      %v662 = vadd.f32 %v594, %v630
      %v663 = vadd.f32 %v595, %v631
      %v664 = vadd.f32 %v596, %v632
      %v665 = vadd.f32 %v597, %v633
      %v666 = vadd.f32 %v598, %v634
      %v667 = vadd.f32 %v599, %v635
      %v668 = vadd.f32 %v600, %v636
      %v669 = vadd.f32 %v601, %v637
      %v670 = vadd.f32 %v602, %v638
      %v671 = vlaneseq
      %v672 = vshrl.u32 %v671, 7
      %v673 = vsub.s32 0, %v672
      %v674 = vrot.slane %v448, %v673
      %v675 = vmul.f32 %v489, %v674
      %v676 = vmul.f32 %v490, %v674
      %v677 = vmul.f32 %v451, %v674
      %v678 = vmul.f32 %v452, %v674
      %v679 = vmul.f32 %v453, %v674
      %v680 = vmul.f32 %v454, %v674
      %v681 = vmul.f32 %v455, %v674
      %v682 = vmul.f32 %v456, %v674
      %v683 = vmul.f32 %v457, %v674
      %v684 = vmul.f32 %v458, %v674
      %v685 = vmul.f32 %v459, %v674
      %v686 = vmul.f32 %v460, %v674
      %v687 = vmul.f32 %v461, %v674
      %v688 = vmul.f32 %v462, %v674
      %v689 = vmul.f32 %v463, %v674
      %v690 = vmul.f32 %v464, %v674
      %v691 = vmul.f32 %v465, %v674
      %v692 = vmul.f32 %v466, %v674
      %v693 = vmul.f32 %v467, %v674
      %v694 = vmul.f32 %v468, %v674
      %v695 = vmul.f32 %v469, %v674
      %v696 = vmul.f32 %v470, %v674
      %v697 = vmul.f32 %v471, %v674
      %v698 = vmul.f32 %v472, %v674
      %v699 = vmul.f32 %v473, %v674
      %v700 = vmul.f32 %v474, %v674
      %v701 = vmul.f32 %v475, %v674
      %v702 = vmul.f32 %v476, %v674
      %v703 = vmul.f32 %v477, %v674
      %v704 = vmul.f32 %v478, %v674
      %v705 = vmul.f32 %v479, %v674
      %v706 = vmul.f32 %v480, %v674
      %v707 = vlaneseq
      %v708 = vshrl.u32 %v707, 7
      %v709 = vsub.s32 0, %v708
      %v710 = vrot.slane %v449, %v709
      %v711 = vmul.f32 %v451, %v710
      %v712 = vmul.f32 %v452, %v710
      %v713 = vmul.f32 %v453, %v710
      %v714 = vmul.f32 %v454, %v710
      %v715 = vmul.f32 %v455, %v710
      %v716 = vmul.f32 %v456, %v710
      %v717 = vmul.f32 %v457, %v710
      %v718 = vmul.f32 %v458, %v710
      %v719 = vmul.f32 %v459, %v710
      %v720 = vmul.f32 %v460, %v710
      %v721 = vmul.f32 %v461, %v710
      %v722 = vmul.f32 %v462, %v710
      %v723 = vmul.f32 %v463, %v710
      %v724 = vmul.f32 %v464, %v710
      %v725 = vmul.f32 %v465, %v710
      %v726 = vmul.f32 %v466, %v710
      %v727 = vmul.f32 %v467, %v710
      %v728 = vmul.f32 %v468, %v710
      %v729 = vmul.f32 %v469, %v710
      %v730 = vmul.f32 %v470, %v710
      %v731 = vmul.f32 %v471, %v710
      %v732 = vmul.f32 %v472, %v710
      %v733 = vmul.f32 %v473, %v710
      %v734 = vmul.f32 %v474, %v710
      %v735 = vmul.f32 %v475, %v710
      %v736 = vmul.f32 %v476, %v710
      %v737 = vmul.f32 %v477, %v710
      %v738 = vmul.f32 %v478, %v710
      %v739 = vmul.f32 %v479, %v710
      %v740 = vmul.f32 %v480, %v710
      %v741 = vmul.f32 %v481, %v710
      %v742 = vmul.f32 %v482, %v710
      %v743 = vadd.f32 %v675, %v711
      %v744 = vadd.f32 %v676, %v712
      %v745 = vadd.f32 %v677, %v713
      %v746 = vadd.f32 %v678, %v714
      %v747 = vadd.f32 %v679, %v715
      %v748 = vadd.f32 %v680, %v716
      %v749 = vadd.f32 %v681, %v717
      %v750 = vadd.f32 %v682, %v718
      %v751 = vadd.f32 %v683, %v719
      %v752 = vadd.f32 %v684, %v720
      %v753 = vadd.f32 %v685, %v721
      %v754 = vadd.f32 %v686, %v722
      %v755 = vadd.f32 %v687, %v723
      %v756 = vadd.f32 %v688, %v724
      %v757 = vadd.f32 %v689, %v725
      %v758 = vadd.f32 %v690, %v726
      %v759 = vadd.f32 %v691, %v727
      %v760 = vadd.f32 %v692, %v728
      %v761 = vadd.f32 %v693, %v729
      %v762 = vadd.f32 %v694, %v730
      %v763 = vadd.f32 %v695, %v731
      %v764 = vadd.f32 %v696, %v732
      %v765 = vadd.f32 %v697, %v733
      %v766 = vadd.f32 %v698, %v734
      %v767 = vadd.f32 %v699, %v735
      %v768 = vadd.f32 %v700, %v736
      %v769 = vadd.f32 %v701, %v737
      %v770 = vadd.f32 %v702, %v738
      %v771 = vadd.f32 %v703, %v739
      %v772 = vadd.f32 %v704, %v740
      %v773 = vadd.f32 %v705, %v741
      %v774 = vadd.f32 %v706, %v742
      %v775 = vlaneseq
      %v776 = vshrl.u32 %v775, 7
      %v777 = vsub.s32 0, %v776
      %v778 = vrot.slane %v450, %v777
      %v779 = vmul.f32 %v453, %v778
      %v780 = vmul.f32 %v454, %v778
      %v781 = vmul.f32 %v455, %v778
      %v782 = vmul.f32 %v456, %v778
      %v783 = vmul.f32 %v457, %v778
      %v784 = vmul.f32 %v458, %v778
      %v785 = vmul.f32 %v459, %v778
      %v786 = vmul.f32 %v460, %v778
      %v787 = vmul.f32 %v461, %v778
      %v788 = vmul.f32 %v462, %v778
      %v789 = vmul.f32 %v463, %v778
      %v790 = vmul.f32 %v464, %v778
      %v791 = vmul.f32 %v465, %v778
      %v792 = vmul.f32 %v466, %v778
      %v793 = vmul.f32 %v467, %v778
      %v794 = vmul.f32 %v468, %v778
      %v795 = vmul.f32 %v469, %v778
      %v796 = vmul.f32 %v470, %v778
      %v797 = vmul.f32 %v471, %v778
      %v798 = vmul.f32 %v472, %v778
      %v799 = vmul.f32 %v473, %v778
      %v800 = vmul.f32 %v474, %v778
      %v801 = vmul.f32 %v475, %v778
      %v802 = vmul.f32 %v476, %v778
      %v803 = vmul.f32 %v477, %v778
      %v804 = vmul.f32 %v478, %v778
      %v805 = vmul.f32 %v479, %v778
      %v806 = vmul.f32 %v480, %v778
      %v807 = vmul.f32 %v481, %v778
      %v808 = vmul.f32 %v482, %v778
      %v809 = vmul.f32 %v497, %v778
      %v810 = vmul.f32 %v498, %v778
      %v811 = vadd.f32 %v743, %v779
      %v812 = vadd.f32 %v744, %v780
      %v813 = vadd.f32 %v745, %v781
      %v814 = vadd.f32 %v746, %v782
      %v815 = vadd.f32 %v747, %v783
      %v816 = vadd.f32 %v748, %v784
      %v817 = vadd.f32 %v749, %v785
      %v818 = vadd.f32 %v750, %v786
      %v819 = vadd.f32 %v751, %v787
      %v820 = vadd.f32 %v752, %v788
      %v821 = vadd.f32 %v753, %v789
      %v822 = vadd.f32 %v754, %v790
      %v823 = vadd.f32 %v755, %v791
      %v824 = vadd.f32 %v756, %v792
      %v825 = vadd.f32 %v757, %v793
      %v826 = vadd.f32 %v758, %v794
      %v827 = vadd.f32 %v759, %v795
      %v828 = vadd.f32 %v760, %v796
      %v829 = vadd.f32 %v761, %v797
      %v830 = vadd.f32 %v762, %v798
      %v831 = vadd.f32 %v763, %v799
      %v832 = vadd.f32 %v764, %v800
      %v833 = vadd.f32 %v765, %v801
      %v834 = vadd.f32 %v766, %v802
      %v835 = vadd.f32 %v767, %v803
      %v836 = vadd.f32 %v768, %v804
      %v837 = vadd.f32 %v769, %v805
      %v838 = vadd.f32 %v770, %v806
      %v839 = vadd.f32 %v771, %v807
      %v840 = vadd.f32 %v772, %v808
      %v841 = vadd.f32 %v773, %v809
      %v842 = vadd.f32 %v774, %v810
      %v843 = vlaneseq
      %v844 = vshrl.u32 %v843, 7
      %v845 = vsub.s32 2, %v844
      %v846 = vrot.slane %v448, %v845
      %v847 = vmul.f32 %v489, %v846
      %v848 = vmul.f32 %v490, %v846
      %v849 = vmul.f32 %v451, %v846
      %v850 = vmul.f32 %v452, %v846
      %v851 = vmul.f32 %v453, %v846
      %v852 = vmul.f32 %v454, %v846
      %v853 = vmul.f32 %v455, %v846
      %v854 = vmul.f32 %v456, %v846
      %v855 = vmul.f32 %v457, %v846
      %v856 = vmul.f32 %v458, %v846
      %v857 = vmul.f32 %v459, %v846
      %v858 = vmul.f32 %v460, %v846
      %v859 = vmul.f32 %v461, %v846
      %v860 = vmul.f32 %v462, %v846
      %v861 = vmul.f32 %v463, %v846
      %v862 = vmul.f32 %v464, %v846
      %v863 = vmul.f32 %v465, %v846
      %v864 = vmul.f32 %v466, %v846
      %v865 = vmul.f32 %v467, %v846
      %v866 = vmul.f32 %v468, %v846
      %v867 = vmul.f32 %v469, %v846
      %v868 = vmul.f32 %v470, %v846
      %v869 = vmul.f32 %v471, %v846
      %v870 = vmul.f32 %v472, %v846
      %v871 = vmul.f32 %v473, %v846
      %v872 = vmul.f32 %v474, %v846
      %v873 = vmul.f32 %v475, %v846
      %v874 = vmul.f32 %v476, %v846
      %v875 = vmul.f32 %v477, %v846
      %v876 = vmul.f32 %v478, %v846
      %v877 = vmul.f32 %v479, %v846
      %v878 = vmul.f32 %v480, %v846
      %v879 = vlaneseq
      %v880 = vshrl.u32 %v879, 7
      %v881 = vsub.s32 2, %v880
      %v882 = vrot.slane %v449, %v881
      %v883 = vmul.f32 %v451, %v882
      %v884 = vmul.f32 %v452, %v882
      %v885 = vmul.f32 %v453, %v882
      %v886 = vmul.f32 %v454, %v882
      %v887 = vmul.f32 %v455, %v882
      %v888 = vmul.f32 %v456, %v882
      %v889 = vmul.f32 %v457, %v882
      %v890 = vmul.f32 %v458, %v882
      %v891 = vmul.f32 %v459, %v882
      %v892 = vmul.f32 %v460, %v882
      %v893 = vmul.f32 %v461, %v882
      %v894 = vmul.f32 %v462, %v882
      %v895 = vmul.f32 %v463, %v882
      %v896 = vmul.f32 %v464, %v882
      %v897 = vmul.f32 %v465, %v882
      %v898 = vmul.f32 %v466, %v882
      %v899 = vmul.f32 %v467, %v882
      %v900 = vmul.f32 %v468, %v882
      %v901 = vmul.f32 %v469, %v882
      %v902 = vmul.f32 %v470, %v882
      %v903 = vmul.f32 %v471, %v882
      %v904 = vmul.f32 %v472, %v882
      %v905 = vmul.f32 %v473, %v882
      %v906 = vmul.f32 %v474, %v882
      %v907 = vmul.f32 %v475, %v882
      %v908 = vmul.f32 %v476, %v882
      %v909 = vmul.f32 %v477, %v882
      %v910 = vmul.f32 %v478, %v882
      %v911 = vmul.f32 %v479, %v882
      %v912 = vmul.f32 %v480, %v882
      %v913 = vmul.f32 %v481, %v882
      %v914 = vmul.f32 %v482, %v882
      %v915 = vadd.f32 %v847, %v883
      %v916 = vadd.f32 %v848, %v884
      %v917 = vadd.f32 %v849, %v885
      %v918 = vadd.f32 %v850, %v886
      %v919 = vadd.f32 %v851, %v887
      %v920 = vadd.f32 %v852, %v888
      %v921 = vadd.f32 %v853, %v889
      %v922 = vadd.f32 %v854, %v890
      %v923 = vadd.f32 %v855, %v891
      %v924 = vadd.f32 %v856, %v892
      %v925 = vadd.f32 %v857, %v893
      %v926 = vadd.f32 %v858, %v894
      %v927 = vadd.f32 %v859, %v895
      %v928 = vadd.f32 %v860, %v896
      %v929 = vadd.f32 %v861, %v897
      %v930 = vadd.f32 %v862, %v898
      %v931 = vadd.f32 %v863, %v899
      %v932 = vadd.f32 %v864, %v900
      %v933 = vadd.f32 %v865, %v901
      %v934 = vadd.f32 %v866, %v902
      %v935 = vadd.f32 %v867, %v903
      %v936 = vadd.f32 %v868, %v904
      %v937 = vadd.f32 %v869, %v905
      %v938 = vadd.f32 %v870, %v906
      %v939 = vadd.f32 %v871, %v907
      %v940 = vadd.f32 %v872, %v908
      %v941 = vadd.f32 %v873, %v909
      %v942 = vadd.f32 %v874, %v910
      %v943 = vadd.f32 %v875, %v911
      %v944 = vadd.f32 %v876, %v912
      %v945 = vadd.f32 %v877, %v913
      %v946 = vadd.f32 %v878, %v914
      %v947 = vlaneseq
      %v948 = vshrl.u32 %v947, 7
      %v949 = vsub.s32 2, %v948
      %v950 = vrot.slane %v450, %v949
      %v951 = vmul.f32 %v453, %v950
      %v952 = vmul.f32 %v454, %v950
      %v953 = vmul.f32 %v455, %v950
      %v954 = vmul.f32 %v456, %v950
      %v955 = vmul.f32 %v457, %v950
      %v956 = vmul.f32 %v458, %v950
      %v957 = vmul.f32 %v459, %v950
      %v958 = vmul.f32 %v460, %v950
      %v959 = vmul.f32 %v461, %v950
      %v960 = vmul.f32 %v462, %v950
      %v961 = vmul.f32 %v463, %v950
      %v962 = vmul.f32 %v464, %v950
      %v963 = vmul.f32 %v465, %v950
      %v964 = vmul.f32 %v466, %v950
      %v965 = vmul.f32 %v467, %v950
      %v966 = vmul.f32 %v468, %v950
      %v967 = vmul.f32 %v469, %v950
      %v968 = vmul.f32 %v470, %v950
      %v969 = vmul.f32 %v471, %v950
      %v970 = vmul.f32 %v472, %v950
      %v971 = vmul.f32 %v473, %v950
      %v972 = vmul.f32 %v474, %v950
      %v973 = vmul.f32 %v475, %v950
      %v974 = vmul.f32 %v476, %v950
      %v975 = vmul.f32 %v477, %v950
      %v976 = vmul.f32 %v478, %v950
      %v977 = vmul.f32 %v479, %v950
      %v978 = vmul.f32 %v480, %v950
      %v979 = vmul.f32 %v481, %v950
      %v980 = vmul.f32 %v482, %v950
      %v981 = vmul.f32 %v497, %v950
      %v982 = vmul.f32 %v498, %v950
      %v983 = vadd.f32 %v915, %v951
      %v984 = vadd.f32 %v916, %v952
      %v985 = vadd.f32 %v917, %v953
      %v986 = vadd.f32 %v918, %v954
      %v987 = vadd.f32 %v919, %v955
      %v988 = vadd.f32 %v920, %v956
      %v989 = vadd.f32 %v921, %v957
      %v990 = vadd.f32 %v922, %v958
      %v991 = vadd.f32 %v923, %v959
      %v992 = vadd.f32 %v924, %v960
      %v993 = vadd.f32 %v925, %v961
      %v994 = vadd.f32 %v926, %v962
      %v995 = vadd.f32 %v927, %v963
      %v996 = vadd.f32 %v928, %v964
      %v997 = vadd.f32 %v929, %v965
      %v998 = vadd.f32 %v930, %v966
      %v999 = vadd.f32 %v931, %v967
      %v1000 = vadd.f32 %v932, %v968
      %v1001 = vadd.f32 %v933, %v969
      %v1002 = vadd.f32 %v934, %v970
      %v1003 = vadd.f32 %v935, %v971
      %v1004 = vadd.f32 %v936, %v972
      %v1005 = vadd.f32 %v937, %v973
      %v1006 = vadd.f32 %v938, %v974
      %v1007 = vadd.f32 %v939, %v975
      %v1008 = vadd.f32 %v940, %v976
      %v1009 = vadd.f32 %v941, %v977
      %v1010 = vadd.f32 %v942, %v978
      %v1011 = vadd.f32 %v943, %v979
      %v1012 = vadd.f32 %v944, %v980
      %v1013 = vadd.f32 %v945, %v981
      %v1014 = vadd.f32 %v946, %v982
      %vm1047 = vcmask 1040384
      %v1048 = vrot.slane %v811, 7
      %v1049 = vrot.slane %v812, 7
      %v1050 = vsel %vm1047, %v1048, %v1049
      %v1051 = vrot.slane %v813, 7
      %v1052 = vrot.slane %v814, 7
      %v1053 = vsel %vm1047, %v1051, %v1052
      %v1054 = vrot.slane %v815, 7
      %v1055 = vrot.slane %v816, 7
      %v1056 = vsel %vm1047, %v1054, %v1055
      %v1057 = vrot.slane %v817, 7
      %v1058 = vrot.slane %v818, 7
      %v1059 = vsel %vm1047, %v1057, %v1058
      %v1060 = vrot.slane %v819, 7
      %v1061 = vrot.slane %v820, 7
      %v1062 = vsel %vm1047, %v1060, %v1061
      %v1063 = vrot.slane %v821, 7
      %v1064 = vrot.slane %v822, 7
      %v1065 = vsel %vm1047, %v1063, %v1064
      %v1066 = vrot.slane %v823, 7
      %v1067 = vrot.slane %v824, 7
      %v1068 = vsel %vm1047, %v1066, %v1067
      %v1069 = vrot.slane %v825, 7
      %v1070 = vrot.slane %v826, 7
      %v1071 = vsel %vm1047, %v1069, %v1070
      %v1072 = vrot.slane %v827, 7
      %v1073 = vrot.slane %v828, 7
      %v1074 = vsel %vm1047, %v1072, %v1073
      %v1075 = vrot.slane %v829, 7
      %v1076 = vrot.slane %v830, 7
      %v1077 = vsel %vm1047, %v1075, %v1076
      %v1078 = vrot.slane %v831, 7
      %v1079 = vrot.slane %v832, 7
      %v1080 = vsel %vm1047, %v1078, %v1079
      %v1081 = vrot.slane %v833, 7
      %v1082 = vrot.slane %v834, 7
      %v1083 = vsel %vm1047, %v1081, %v1082
      %v1084 = vrot.slane %v835, 7
      %v1085 = vrot.slane %v836, 7
      %v1086 = vsel %vm1047, %v1084, %v1085
      %v1087 = vrot.slane %v837, 7
      %v1088 = vrot.slane %v838, 7
      %v1089 = vsel %vm1047, %v1087, %v1088
      %v1090 = vrot.slane %v839, 7
      %v1091 = vrot.slane %v840, 7
      %v1092 = vsel %vm1047, %v1090, %v1091
      %v1093 = vrot.slane %v841, 7
      %v1094 = vrot.slane %v842, 7
      %v1095 = vsel %vm1047, %v1093, %v1094
      %v1128 = vsel %vm1047, 0.0, %v1048
      %v1129 = vsel %vm1047, 0.0, %v1051
      %v1130 = vsel %vm1047, 0.0, %v1054
      %v1131 = vsel %vm1047, 0.0, %v1057
      %v1132 = vsel %vm1047, 0.0, %v1060
      %v1133 = vsel %vm1047, 0.0, %v1063
      %v1134 = vsel %vm1047, 0.0, %v1066
      %v1135 = vsel %vm1047, 0.0, %v1069
      %v1136 = vsel %vm1047, 0.0, %v1072
      %v1137 = vsel %vm1047, 0.0, %v1075
      %v1138 = vsel %vm1047, 0.0, %v1078
      %v1139 = vsel %vm1047, 0.0, %v1081
      %v1140 = vsel %vm1047, 0.0, %v1084
      %v1141 = vsel %vm1047, 0.0, %v1087
      %v1142 = vsel %vm1047, 0.0, %v1090
      %v1143 = vsel %vm1047, 0.0, %v1093
      %v1144 = vadd.f32 %v639, %v1128
      %v1145 = vadd.f32 %v640, %v1050
      %v1146 = vadd.f32 %v641, %v1129
      %v1147 = vadd.f32 %v642, %v1053
      %v1148 = vadd.f32 %v643, %v1130
      %v1149 = vadd.f32 %v644, %v1056
      %v1150 = vadd.f32 %v645, %v1131
      %v1151 = vadd.f32 %v646, %v1059
      %v1152 = vadd.f32 %v647, %v1132
      %v1153 = vadd.f32 %v648, %v1062
      %v1154 = vadd.f32 %v649, %v1133
      %v1155 = vadd.f32 %v650, %v1065
      %v1156 = vadd.f32 %v651, %v1134
      %v1157 = vadd.f32 %v652, %v1068
      %v1158 = vadd.f32 %v653, %v1135
      %v1159 = vadd.f32 %v654, %v1071
      %v1160 = vadd.f32 %v655, %v1136
      %v1161 = vadd.f32 %v656, %v1074
      %v1162 = vadd.f32 %v657, %v1137
      %v1163 = vadd.f32 %v658, %v1077
      %v1164 = vadd.f32 %v659, %v1138
      %v1165 = vadd.f32 %v660, %v1080
      %v1166 = vadd.f32 %v661, %v1139
      %v1167 = vadd.f32 %v662, %v1083
      %v1168 = vadd.f32 %v663, %v1140
      %v1169 = vadd.f32 %v664, %v1086
      %v1170 = vadd.f32 %v665, %v1141
      %v1171 = vadd.f32 %v666, %v1089
      %v1172 = vadd.f32 %v667, %v1142
      %v1173 = vadd.f32 %v668, %v1092
      %v1174 = vadd.f32 %v669, %v1143
      %v1175 = vadd.f32 %v670, %v1095
      %vm1208 = vcmask 1046528
      %v1209 = vrot.slane %v983, 1
      %v1210 = vrot.slane %v984, 1
      %v1211 = vsel %vm1208, %v1209, %v1210
      %v1212 = vrot.slane %v985, 1
      %v1213 = vrot.slane %v986, 1
      %v1214 = vsel %vm1208, %v1212, %v1213
      %v1215 = vrot.slane %v987, 1
      %v1216 = vrot.slane %v988, 1
      %v1217 = vsel %vm1208, %v1215, %v1216
      %v1218 = vrot.slane %v989, 1
      %v1219 = vrot.slane %v990, 1
      %v1220 = vsel %vm1208, %v1218, %v1219
      %v1221 = vrot.slane %v991, 1
      %v1222 = vrot.slane %v992, 1
      %v1223 = vsel %vm1208, %v1221, %v1222
      %v1224 = vrot.slane %v993, 1
      %v1225 = vrot.slane %v994, 1
      %v1226 = vsel %vm1208, %v1224, %v1225
      %v1227 = vrot.slane %v995, 1
      %v1228 = vrot.slane %v996, 1
      %v1229 = vsel %vm1208, %v1227, %v1228
      %v1230 = vrot.slane %v997, 1
      %v1231 = vrot.slane %v998, 1
      %v1232 = vsel %vm1208, %v1230, %v1231
      %v1233 = vrot.slane %v999, 1
      %v1234 = vrot.slane %v1000, 1
      %v1235 = vsel %vm1208, %v1233, %v1234
      %v1236 = vrot.slane %v1001, 1
      %v1237 = vrot.slane %v1002, 1
      %v1238 = vsel %vm1208, %v1236, %v1237
      %v1239 = vrot.slane %v1003, 1
      %v1240 = vrot.slane %v1004, 1
      %v1241 = vsel %vm1208, %v1239, %v1240
      %v1242 = vrot.slane %v1005, 1
      %v1243 = vrot.slane %v1006, 1
      %v1244 = vsel %vm1208, %v1242, %v1243
      %v1245 = vrot.slane %v1007, 1
      %v1246 = vrot.slane %v1008, 1
      %v1247 = vsel %vm1208, %v1245, %v1246
      %v1248 = vrot.slane %v1009, 1
      %v1249 = vrot.slane %v1010, 1
      %v1250 = vsel %vm1208, %v1248, %v1249
      %v1251 = vrot.slane %v1011, 1
      %v1252 = vrot.slane %v1012, 1
      %v1253 = vsel %vm1208, %v1251, %v1252
      %v1254 = vrot.slane %v1013, 1
      %v1255 = vrot.slane %v1014, 1
      %v1256 = vsel %vm1208, %v1254, %v1255
      %v1289 = vsel %vm1208, %v1210, 0.0
      %v1290 = vsel %vm1208, %v1213, 0.0
      %v1291 = vsel %vm1208, %v1216, 0.0
      %v1292 = vsel %vm1208, %v1219, 0.0
      %v1293 = vsel %vm1208, %v1222, 0.0
      %v1294 = vsel %vm1208, %v1225, 0.0
      %v1295 = vsel %vm1208, %v1228, 0.0
      %v1296 = vsel %vm1208, %v1231, 0.0
      %v1297 = vsel %vm1208, %v1234, 0.0
      %v1298 = vsel %vm1208, %v1237, 0.0
      %v1299 = vsel %vm1208, %v1240, 0.0
      %v1300 = vsel %vm1208, %v1243, 0.0
      %v1301 = vsel %vm1208, %v1246, 0.0
      %v1302 = vsel %vm1208, %v1249, 0.0
      %v1303 = vsel %vm1208, %v1252, 0.0
      %v1304 = vsel %vm1208, %v1255, 0.0
      %v1305 = vadd.f32 %v1144, %v1211
      %v1306 = vadd.f32 %v1145, %v1289
      %v1307 = vadd.f32 %v1146, %v1214
      %v1308 = vadd.f32 %v1147, %v1290
      %v1309 = vadd.f32 %v1148, %v1217
      %v1310 = vadd.f32 %v1149, %v1291
      %v1311 = vadd.f32 %v1150, %v1220
      %v1312 = vadd.f32 %v1151, %v1292
      %v1313 = vadd.f32 %v1152, %v1223
      %v1314 = vadd.f32 %v1153, %v1293
      %v1315 = vadd.f32 %v1154, %v1226
      %v1316 = vadd.f32 %v1155, %v1294
      %v1317 = vadd.f32 %v1156, %v1229
      %v1318 = vadd.f32 %v1157, %v1295
      %v1319 = vadd.f32 %v1158, %v1232
      %v1320 = vadd.f32 %v1159, %v1296
      %v1321 = vadd.f32 %v1160, %v1235
      %v1322 = vadd.f32 %v1161, %v1297
      %v1323 = vadd.f32 %v1162, %v1238
      %v1324 = vadd.f32 %v1163, %v1298
      %v1325 = vadd.f32 %v1164, %v1241
      %v1326 = vadd.f32 %v1165, %v1299
      %v1327 = vadd.f32 %v1166, %v1244
      %v1328 = vadd.f32 %v1167, %v1300
      %v1329 = vadd.f32 %v1168, %v1247
      %v1330 = vadd.f32 %v1169, %v1301
      %v1331 = vadd.f32 %v1170, %v1250
      %v1332 = vadd.f32 %v1171, %v1302
      %v1333 = vadd.f32 %v1172, %v1253
      %v1334 = vadd.f32 %v1173, %v1303
      %v1335 = vadd.f32 %v1174, %v1256
      %v1336 = vadd.f32 %v1175, %v1304
      %v1337 = vld [vmem:[%s4] sm:$0x1]
      %v1339 = vlaneseq
      %v1340 = vshrl.u32 %v1339, 7
      %v1341 = vsub.s32 0, %v1340
      %v1342 = vrot.slane %v1337, %v1341
      %v1344 = vadd.f32 %v1305, %v1342
      %v1345 = vadd.f32 %v1306, %v1342
      %v1346 = vadd.f32 %v1307, %v1342
      %v1347 = vadd.f32 %v1308, %v1342
      %v1348 = vadd.f32 %v1309, %v1342
      %v1349 = vadd.f32 %v1310, %v1342
      %v1350 = vadd.f32 %v1311, %v1342
      %v1351 = vadd.f32 %v1312, %v1342
      %v1352 = vadd.f32 %v1313, %v1342
      %v1353 = vadd.f32 %v1314, %v1342
      %v1354 = vadd.f32 %v1315, %v1342
      %v1355 = vadd.f32 %v1316, %v1342
      %v1356 = vadd.f32 %v1317, %v1342
      %v1357 = vadd.f32 %v1318, %v1342
      %v1358 = vadd.f32 %v1319, %v1342
      %v1359 = vadd.f32 %v1320, %v1342
      %v1360 = vadd.f32 %v1321, %v1342
      %v1361 = vadd.f32 %v1322, %v1342
      %v1362 = vadd.f32 %v1323, %v1342
      %v1363 = vadd.f32 %v1324, %v1342
      %v1364 = vadd.f32 %v1325, %v1342
      %v1365 = vadd.f32 %v1326, %v1342
      %v1366 = vadd.f32 %v1327, %v1342
      %v1367 = vadd.f32 %v1328, %v1342
      %v1368 = vadd.f32 %v1329, %v1342
      %v1369 = vadd.f32 %v1330, %v1342
      %v1370 = vadd.f32 %v1331, %v1342
      %v1371 = vadd.f32 %v1332, %v1342
      %v1372 = vadd.f32 %v1333, %v1342
      %v1373 = vadd.f32 %v1334, %v1342
      %v1374 = vadd.f32 %v1335, %v1342
      %v1375 = vadd.f32 %v1336, %v1342
      %v1376 = vmax.f32 %v1344, 0.0
      %v1377 = vmax.f32 %v1345, 0.0
      %v1378 = vmax.f32 %v1346, 0.0
      %v1379 = vmax.f32 %v1347, 0.0
      %v1380 = vmax.f32 %v1348, 0.0
      %v1381 = vmax.f32 %v1349, 0.0
      %v1382 = vmax.f32 %v1350, 0.0
      %v1383 = vmax.f32 %v1351, 0.0
      %v1384 = vmax.f32 %v1352, 0.0
      %v1385 = vmax.f32 %v1353, 0.0
      %v1386 = vmax.f32 %v1354, 0.0
      %v1387 = vmax.f32 %v1355, 0.0
      %v1388 = vmax.f32 %v1356, 0.0
      %v1389 = vmax.f32 %v1357, 0.0
      %v1390 = vmax.f32 %v1358, 0.0
      %v1391 = vmax.f32 %v1359, 0.0
      %v1392 = vmax.f32 %v1360, 0.0
      %v1393 = vmax.f32 %v1361, 0.0
      %v1394 = vmax.f32 %v1362, 0.0
      %v1395 = vmax.f32 %v1363, 0.0
      %v1396 = vmax.f32 %v1364, 0.0
      %v1397 = vmax.f32 %v1365, 0.0
      %v1398 = vmax.f32 %v1366, 0.0
      %v1399 = vmax.f32 %v1367, 0.0
      %v1400 = vmax.f32 %v1368, 0.0
      %v1401 = vmax.f32 %v1369, 0.0
      %v1402 = vmax.f32 %v1370, 0.0
      %v1403 = vmax.f32 %v1371, 0.0
      %v1404 = vmax.f32 %v1372, 0.0
      %v1405 = vmax.f32 %v1373, 0.0
      %v1406 = vmax.f32 %v1374, 0.0
      %v1407 = vmax.f32 %v1375, 0.0
      %v1408 = vpack.c.bf16 %v1377, %v1376
      %v1409 = vpack.c.bf16 %v1379, %v1378
      %v1410 = vpack.c.bf16 %v1381, %v1380
      %v1411 = vpack.c.bf16 %v1383, %v1382
      %v1412 = vpack.c.bf16 %v1385, %v1384
      %v1413 = vpack.c.bf16 %v1387, %v1386
      %v1414 = vpack.c.bf16 %v1389, %v1388
      %v1415 = vpack.c.bf16 %v1391, %v1390
      %v1416 = vpack.c.bf16 %v1393, %v1392
      %v1417 = vpack.c.bf16 %v1395, %v1394
      %v1418 = vpack.c.bf16 %v1397, %v1396
      %v1419 = vpack.c.bf16 %v1399, %v1398
      %v1420 = vpack.c.bf16 %v1401, %v1400
      %v1421 = vpack.c.bf16 %v1403, %v1402
      %v1422 = vpack.c.bf16 %v1405, %v1404
      %v1423 = vpack.c.bf16 %v1407, %v1406
      %v1424 = vld [vmem:[%s5] sm:$0x3]
      %v1425 = vld [vmem:[%s6] sm:$0x1]
      %v1427 = vlaneseq
      %v1428 = vshrl.u32 %v1427, 7
      %v1429 = vsub.s32 0, %v1428
      %v1430 = vrot.slane %v1425, %v1429
      %vm1432 = vcmask 31744
      %v1434 = vsel %vm1432, %v1408, 0
      %v1437 = vsel %vm1432, %v1409, 0
      %v1440 = vsel %vm1432, %v1410, 0
      %v1443 = vsel %vm1432, %v1411, 0
      %v1446 = vsel %vm1432, %v1412, 0
      %v1449 = vsel %vm1432, %v1413, 0
      %v1452 = vsel %vm1432, %v1414, 0
      %v1455 = vsel %vm1432, %v1415, 0
      %v1458 = vsel %vm1432, %v1416, 0
      %v1461 = vsel %vm1432, %v1417, 0
      %v1464 = vsel %vm1432, %v1418, 0
      %v1467 = vsel %vm1432, %v1419, 0
      %v1470 = vsel %vm1432, %v1420, 0
      %v1473 = vsel %vm1432, %v1421, 0
      %v1476 = vsel %vm1432, %v1422, 0
      %v1479 = vsel %vm1432, %v1423, 0
      %vm1481 = vcmask 1041408
      %v1483 = vsel %vm1481, %v1424, 0
      %1485 = vmatprep.subr.bf16.mxu0 0
      %1486 = vmatpush1.bf16.msra.mxu0 %v1483
      %1487 = vmatprep.subr.bf16.mxu0 0
      %1488 = vmatpush1.bf16.msra.mxu0 0
      %1489 = vmatprep.subr.bf16.mxu0 0
      %1490 = vmatpush1.bf16.msra.mxu0 0
      %1491 = vmatprep.subr.bf16.mxu0 0
      %1492 = vmatpush1.bf16.msra.mxu0 0
      %1493 = vmatprep.subr.bf16.mxu0 0
      %1494 = vmatpush1.bf16.msra.mxu0 0
      %1495 = vmatprep.subr.bf16.mxu0 0
      %1496 = vmatpush1.bf16.msra.mxu0 0
      %1497 = vmatprep.subr.bf16.mxu0 0
      %1498 = vmatpush1.bf16.msra.mxu0 0
      %1499 = vmatprep.subr.bf16.mxu0 0
      %1500 = vmatpush1.bf16.msra.mxu0 0
      %1501 = vmatprep.subr.bf16.mxu0 0
      %1502 = vmatpush1.bf16.msra.mxu0 0
      %1503 = vmatprep.subr.bf16.mxu0 0
      %1504 = vmatpush1.bf16.msra.mxu0 0
      %1505 = vmatprep.subr.bf16.mxu0 0
      %1506 = vmatpush1.bf16.msra.mxu0 0
      %1507 = vmatprep.subr.bf16.mxu0 0
      %1508 = vmatpush1.bf16.msra.mxu0 0
      %1509 = vmatprep.subr.bf16.mxu0 0
      %1510 = vmatpush1.bf16.msra.mxu0 0
      %1511 = vmatprep.subr.bf16.mxu0 0
      %1512 = vmatpush1.bf16.msra.mxu0 0
      %1513 = vmatprep.subr.bf16.mxu0 0
      %1514 = vmatpush1.bf16.msra.mxu0 0
      %1515 = vmatprep.subr.bf16.mxu0 0
      %1516 = vmatpush1.bf16.msra.mxu0 0
      %1517 = vmatprep.mubr.bf16.mxu0 0
      %1518 = vmatmul.mubr.bf16.gmra.mrb[0].mxu0 %v1434
      %v1519 = vpop.f32.mrb[0].mxu0
      %v1520 = vadd.f32 %v1430, %v1519
      %v1521 = vpop.f32.mrb[0].mxu0
      %v1522 = vpop.f32.mrb[0].mxu0
      %v1523 = vadd.f32 %v1430, %v1522
      %v1524 = vpop.f32.mrb[0].mxu0
      %1525 = vmatprep.mubr.bf16.mxu0 0
      %1526 = vmatmul.mubr.bf16.gmra.mrb[0].mxu0 %v1437
      %v1527 = vpop.f32.mrb[0].mxu0
      %v1528 = vadd.f32 %v1430, %v1527
      %v1529 = vpop.f32.mrb[0].mxu0
      %v1530 = vpop.f32.mrb[0].mxu0
      %v1531 = vadd.f32 %v1430, %v1530
      %v1532 = vpop.f32.mrb[0].mxu0
      %1533 = vmatprep.mubr.bf16.mxu0 0
      %1534 = vmatmul.mubr.bf16.gmra.mrb[0].mxu0 %v1440
      %v1535 = vpop.f32.mrb[0].mxu0
      %v1536 = vadd.f32 %v1430, %v1535
      %v1537 = vpop.f32.mrb[0].mxu0
      %v1538 = vpop.f32.mrb[0].mxu0
      %v1539 = vadd.f32 %v1430, %v1538
      %v1540 = vpop.f32.mrb[0].mxu0
      %1541 = vmatprep.mubr.bf16.mxu0 0
      %1542 = vmatmul.mubr.bf16.gmra.mrb[0].mxu0 %v1443
      %v1543 = vpop.f32.mrb[0].mxu0
      %v1544 = vadd.f32 %v1430, %v1543
      %v1545 = vpop.f32.mrb[0].mxu0
      %v1546 = vpop.f32.mrb[0].mxu0
      %v1547 = vadd.f32 %v1430, %v1546
      %v1548 = vpop.f32.mrb[0].mxu0
      %1549 = vmatprep.mubr.bf16.mxu0 0
      %1550 = vmatmul.mubr.bf16.gmra.mrb[0].mxu0 %v1446
      %v1551 = vpop.f32.mrb[0].mxu0
      %v1552 = vadd.f32 %v1430, %v1551
      %v1553 = vpop.f32.mrb[0].mxu0
      %v1554 = vpop.f32.mrb[0].mxu0
      %v1555 = vadd.f32 %v1430, %v1554
      %v1556 = vpop.f32.mrb[0].mxu0
      %1557 = vmatprep.mubr.bf16.mxu0 0
      %1558 = vmatmul.mubr.bf16.gmra.mrb[0].mxu0 %v1449
      %v1559 = vpop.f32.mrb[0].mxu0
      %v1560 = vadd.f32 %v1430, %v1559
      %v1561 = vpop.f32.mrb[0].mxu0
      %v1562 = vpop.f32.mrb[0].mxu0
      %v1563 = vadd.f32 %v1430, %v1562
      %v1564 = vpop.f32.mrb[0].mxu0
      %1565 = vmatprep.mubr.bf16.mxu0 0
      %1566 = vmatmul.mubr.bf16.gmra.mrb[0].mxu0 %v1452
      %v1567 = vpop.f32.mrb[0].mxu0
      %v1568 = vadd.f32 %v1430, %v1567
      %v1569 = vpop.f32.mrb[0].mxu0
      %v1570 = vpop.f32.mrb[0].mxu0
      %v1571 = vadd.f32 %v1430, %v1570
      %v1572 = vpop.f32.mrb[0].mxu0
      %1573 = vmatprep.mubr.bf16.mxu0 0
      %1574 = vmatmul.mubr.bf16.gmra.mrb[0].mxu0 %v1455
      %v1575 = vpop.f32.mrb[0].mxu0
      %v1576 = vadd.f32 %v1430, %v1575
      %v1577 = vpop.f32.mrb[0].mxu0
      %v1578 = vpop.f32.mrb[0].mxu0
      %v1579 = vadd.f32 %v1430, %v1578
      %v1580 = vpop.f32.mrb[0].mxu0
      %1581 = vmatprep.mubr.bf16.mxu0 0
      %1582 = vmatmul.mubr.bf16.gmra.mrb[0].mxu0 %v1458
      %v1583 = vpop.f32.mrb[0].mxu0
      %v1584 = vadd.f32 %v1430, %v1583
      %v1585 = vpop.f32.mrb[0].mxu0
      %v1586 = vpop.f32.mrb[0].mxu0
      %v1587 = vadd.f32 %v1430, %v1586
      %v1588 = vpop.f32.mrb[0].mxu0
      %1589 = vmatprep.mubr.bf16.mxu0 0
      %1590 = vmatmul.mubr.bf16.gmra.mrb[0].mxu0 %v1461
      %v1591 = vpop.f32.mrb[0].mxu0
      %v1592 = vadd.f32 %v1430, %v1591
      %v1593 = vpop.f32.mrb[0].mxu0
      %v1594 = vpop.f32.mrb[0].mxu0
      %v1595 = vadd.f32 %v1430, %v1594
      %v1596 = vpop.f32.mrb[0].mxu0
      %1597 = vmatprep.mubr.bf16.mxu0 0
      %1598 = vmatmul.mubr.bf16.gmra.mrb[0].mxu0 %v1464
      %v1599 = vpop.f32.mrb[0].mxu0
      %v1600 = vadd.f32 %v1430, %v1599
      %v1601 = vpop.f32.mrb[0].mxu0
      %v1602 = vpop.f32.mrb[0].mxu0
      %v1603 = vadd.f32 %v1430, %v1602
      %v1604 = vpop.f32.mrb[0].mxu0
      %1605 = vmatprep.mubr.bf16.mxu0 0
      %1606 = vmatmul.mubr.bf16.gmra.mrb[0].mxu0 %v1467
      %v1607 = vpop.f32.mrb[0].mxu0
      %v1608 = vadd.f32 %v1430, %v1607
      %v1609 = vpop.f32.mrb[0].mxu0
      %v1610 = vpop.f32.mrb[0].mxu0
      %v1611 = vadd.f32 %v1430, %v1610
      %v1612 = vpop.f32.mrb[0].mxu0
      %1613 = vmatprep.mubr.bf16.mxu0 0
      %1614 = vmatmul.mubr.bf16.gmra.mrb[0].mxu0 %v1470
      %v1615 = vpop.f32.mrb[0].mxu0
      %v1616 = vadd.f32 %v1430, %v1615
      %v1617 = vpop.f32.mrb[0].mxu0
      %v1618 = vpop.f32.mrb[0].mxu0
      %v1619 = vadd.f32 %v1430, %v1618
      %v1620 = vpop.f32.mrb[0].mxu0
      %1621 = vmatprep.mubr.bf16.mxu0 0
      %1622 = vmatmul.mubr.bf16.gmra.mrb[0].mxu0 %v1473
      %v1623 = vpop.f32.mrb[0].mxu0
      %v1624 = vadd.f32 %v1430, %v1623
      %v1625 = vpop.f32.mrb[0].mxu0
      %v1626 = vpop.f32.mrb[0].mxu0
      %v1627 = vadd.f32 %v1430, %v1626
      %v1628 = vpop.f32.mrb[0].mxu0
      %1629 = vmatprep.mubr.bf16.mxu0 0
      %1630 = vmatmul.mubr.bf16.gmra.mrb[0].mxu0 %v1476
      %v1631 = vpop.f32.mrb[0].mxu0
      %v1632 = vadd.f32 %v1430, %v1631
      %v1633 = vpop.f32.mrb[0].mxu0
      %v1634 = vpop.f32.mrb[0].mxu0
      %v1635 = vadd.f32 %v1430, %v1634
      %v1636 = vpop.f32.mrb[0].mxu0
      %1637 = vmatprep.mubr.bf16.mxu0 0
      %1638 = vmatmul.mubr.bf16.gmra.mrb[0].mxu0 %v1479
      %v1639 = vpop.f32.mrb[0].mxu0
      %v1640 = vadd.f32 %v1430, %v1639
      %v1641 = vpop.f32.mrb[0].mxu0
      %v1642 = vpop.f32.mrb[0].mxu0
      %v1643 = vadd.f32 %v1430, %v1642
      %v1644 = vpop.f32.mrb[0].mxu0
      %1645 = vdwg.mxu0
      %v1646 = vmax.f32 %v1520, 0.0
      %v1647 = vmax.f32 %v1523, 0.0
      %v1648 = vmax.f32 %v1528, 0.0
      %v1649 = vmax.f32 %v1531, 0.0
      %v1650 = vmax.f32 %v1536, 0.0
      %v1651 = vmax.f32 %v1539, 0.0
      %v1652 = vmax.f32 %v1544, 0.0
      %v1653 = vmax.f32 %v1547, 0.0
      %v1654 = vmax.f32 %v1552, 0.0
      %v1655 = vmax.f32 %v1555, 0.0
      %v1656 = vmax.f32 %v1560, 0.0
      %v1657 = vmax.f32 %v1563, 0.0
      %v1658 = vmax.f32 %v1568, 0.0
      %v1659 = vmax.f32 %v1571, 0.0
      %v1660 = vmax.f32 %v1576, 0.0
      %v1661 = vmax.f32 %v1579, 0.0
      %v1662 = vmax.f32 %v1584, 0.0
      %v1663 = vmax.f32 %v1587, 0.0
      %v1664 = vmax.f32 %v1592, 0.0
      %v1665 = vmax.f32 %v1595, 0.0
      %v1666 = vmax.f32 %v1600, 0.0
      %v1667 = vmax.f32 %v1603, 0.0
      %v1668 = vmax.f32 %v1608, 0.0
      %v1669 = vmax.f32 %v1611, 0.0
      %v1670 = vmax.f32 %v1616, 0.0
      %v1671 = vmax.f32 %v1619, 0.0
      %v1672 = vmax.f32 %v1624, 0.0
      %v1673 = vmax.f32 %v1627, 0.0
      %v1674 = vmax.f32 %v1632, 0.0
      %v1675 = vmax.f32 %v1635, 0.0
      %v1676 = vmax.f32 %v1640, 0.0
      %v1677 = vmax.f32 %v1643, 0.0
      %vm1678 = vcmask 64512
      %1679 = vst.msk [vmem:[%s445] sm:$0xff] %vm1678, %v1646
      %1680 = vst.msk [vmem:[%s445 + $0x8] sm:$0xff] %vm1678, %v1647
      %1681 = vst.msk [vmem:[%s445 + $0x10] sm:$0xff] %vm1678, %v1648
      %1682 = vst.msk [vmem:[%s445 + $0x18] sm:$0xff] %vm1678, %v1649
      %1683 = vst.msk [vmem:[%s445 + $0x20] sm:$0xff] %vm1678, %v1650
      %1684 = vst.msk [vmem:[%s445 + $0x28] sm:$0xff] %vm1678, %v1651
      %1685 = vst.msk [vmem:[%s445 + $0x30] sm:$0xff] %vm1678, %v1652
      %1686 = vst.msk [vmem:[%s445 + $0x38] sm:$0xff] %vm1678, %v1653
      %1687 = vst.msk [vmem:[%s445 + $0x40] sm:$0xff] %vm1678, %v1654
      %1688 = vst.msk [vmem:[%s445 + $0x48] sm:$0xff] %vm1678, %v1655
      %1689 = vst.msk [vmem:[%s445 + $0x50] sm:$0xff] %vm1678, %v1656
      %1690 = vst.msk [vmem:[%s445 + $0x58] sm:$0xff] %vm1678, %v1657
      %1691 = vst.msk [vmem:[%s445 + $0x60] sm:$0xff] %vm1678, %v1658
      %1692 = vst.msk [vmem:[%s445 + $0x68] sm:$0xff] %vm1678, %v1659
      %1693 = vst.msk [vmem:[%s445 + $0x70] sm:$0xff] %vm1678, %v1660
      %1694 = vst.msk [vmem:[%s445 + $0x78] sm:$0xff] %vm1678, %v1661
      %1695 = vst.msk [vmem:[%s445 + $0x80] sm:$0xff] %vm1678, %v1662
      %1696 = vst.msk [vmem:[%s445 + $0x88] sm:$0xff] %vm1678, %v1663
      %1697 = vst.msk [vmem:[%s445 + $0x90] sm:$0xff] %vm1678, %v1664
      %1698 = vst.msk [vmem:[%s445 + $0x98] sm:$0xff] %vm1678, %v1665
      %1699 = vst.msk [vmem:[%s445 + $0xa0] sm:$0xff] %vm1678, %v1666
      %1700 = vst.msk [vmem:[%s445 + $0xa8] sm:$0xff] %vm1678, %v1667
      %1701 = vst.msk [vmem:[%s445 + $0xb0] sm:$0xff] %vm1678, %v1668
      %1702 = vst.msk [vmem:[%s445 + $0xb8] sm:$0xff] %vm1678, %v1669
      %1703 = vst.msk [vmem:[%s445 + $0xc0] sm:$0xff] %vm1678, %v1670
      %1704 = vst.msk [vmem:[%s445 + $0xc8] sm:$0xff] %vm1678, %v1671
      %1705 = vst.msk [vmem:[%s445 + $0xd0] sm:$0xff] %vm1678, %v1672
      %1706 = vst.msk [vmem:[%s445 + $0xd8] sm:$0xff] %vm1678, %v1673
      %1707 = vst.msk [vmem:[%s445 + $0xe0] sm:$0xff] %vm1678, %v1674
      %1708 = vst.msk [vmem:[%s445 + $0xe8] sm:$0xff] %vm1678, %v1675
      %1709 = vst.msk [vmem:[%s445 + $0xf0] sm:$0xff] %vm1678, %v1676
      %1710 = vst.msk [vmem:[%s445 + $0xf8] sm:$0xff] %vm1678, %v1677
      %s1711 = smul.u32 16, %s23
      %p1712 = scmp.lt.s32.totalorder %s22, 1
      %s1713 = scalar_select %p1712, %s22, 1
      %p1714 = scmp.lt.s32.totalorder %s1711, 15
      %s1715 = scalar_select %p1714, %s1711, 15
      %s1716 = smul.addr %s1715, 2
      %s1717 = smul.addr %s1713, 32
      %s1718 = sadd.s32 %s1716, %s1717
      %s1719 = smul.addr %s1718, 8
      %s1720 = scalar_lea.vmem %s7, %s1719
      // Predicated region
      $region49: #{dsconv3x3_pallas.1} parent=47 // pred_check
        %p1721 = pneg %p234
      $region50: #{dsconv3x3_pallas.1} parent=47 // pred_check_branch
        %1723 = sbr.rel (%p1721) target = $region52
      $region51: #{dsconv3x3_pallas.1} parent=47 // pred_region
        %s1724 = smul.u32 16, %s23
      $region52: #{dsconv3x3_pallas.1} parent=47 // pred_fallthru
        _
    $region48: #{dsconv3x3_pallas.1} parent=5 // pred_fallthru
      _
    %p1725 = scmp.le.s32.totalorder 2, %s13
    // Predicated region
    $region53: #{dsconv3x3_pallas.1} parent=5 // pred_check
      %p1726 = pneg %p1725
    $region54: #{dsconv3x3_pallas.1} parent=5 // pred_check_branch
      %1728 = sbr.rel (%p1726) target = $region56
    $region55: #{dsconv3x3_pallas.1} parent=5 // pred_region
      %s1729 = ssub.s32 %s13, 2
      // Predicated region
      $region57: #{dsconv3x3_pallas.1} parent=55 // pred_check
        %p1730 = pneg %p240
      $region58: #{dsconv3x3_pallas.1} parent=55 // pred_check_branch
        %1732 = sbr.rel (%p1730) target = $region60
      $region59: #{dsconv3x3_pallas.1} parent=55 // pred_region
        %s1733 = smul.u32 16, %s25
        %p1734 = scmp.lt.s32.totalorder %s24, 1
        %s1735 = scalar_select %p1734, %s24, 1
        %p1736 = scmp.lt.s32.totalorder %s1733, 15
        %s1737 = scalar_select %p1736, %s1733, 15
        %s1738 = smul.addr %s1737, 2
        %s1739 = smul.addr %s1735, 32
        %s1740 = sadd.s32 %s1738, %s1739
        %s1741 = smul.addr %s1740, 8
        %s1742 = scalar_lea.vmem %s7, %s1741
      $region60: #{dsconv3x3_pallas.1} parent=55 // pred_fallthru
        _
    $region56: #{dsconv3x3_pallas.1} parent=5 // pred_fallthru
      _
  $region6: #{dsconv3x3_pallas.1} parent=0 // loop_footer
    %s17 = sadd.s32 1, %s13
  $region7: #{dsconv3x3_pallas.1} parent=0 // loop_footer_branch
    %12 = sbr.rel target = $region3
  $region8: #{dsconv3x3_pallas.1} parent=0 // loop_exit
    _

</llo_original>
